<compile_context>
chip_gen: v6e
topology: v6e:2x2x1
jax: 0.10.0
libtpu: 0.0.40
codegen_flags: <defaults>
</compile_context>

<pallas_src>
import numpy as np
import jax
import jax.numpy as jnp
from jax import lax
from jax.experimental import pallas as pl
from jax.experimental.pallas import tpu as pltpu


# ---------------------------------------------------------------------------
# Pallas kernel
# ---------------------------------------------------------------------------
def _make_dblock_kernel(H, W, c_in, c_out, apply_relu, apply_down, use_1x1):
  """Fused DBlock forward for one batch element (grid iterates over batch)."""
  WCi, WCo = W * c_in, W * c_out

  def kernel(x_ref, w1_ref, b1_ref, w3a_ref, b3a_ref, w3b_ref, b3b_ref, *rest):
    if apply_down:
      ph_ref, pw_ref, y_ref, xp_ref, hp_ref = rest
    else:
      y_ref, xp_ref, hp_ref = rest

    x2d = x_ref[...]                                        # (H, W*c_in)

    # ---------------- residual branch --------------------------------------
    # 1x1 conv == one block-diagonal (H, W*c_in) @ (W*c_in, W*c_out) matmul.
    if use_1x1:
      res = (jnp.dot(x2d, w1_ref[...], preferred_element_type=jnp.float32)
             + b1_ref[...])
    else:
      res = x2d                                             # c_in == c_out

    # ---------------- main branch -------------------------------------------
    h0 = jnp.maximum(x2d, 0.0) if apply_relu else x2d

    # Vertically padded input rows (horizontal zero-padding is encoded in the
    # banded weight matrices, so only two border rows need zeroing).  The
    # interior is fully overwritten every grid step, so this is safe under
    # "parallel" batch sharding.
    zrow_i = jnp.zeros((1, WCi), jnp.float32)
    xp_ref[pl.ds(0, 1), :] = zrow_i
    xp_ref[pl.ds(H + 1, 1), :] = zrow_i
    xp_ref[pl.ds(1, H), :] = h0

    # conv3x3_1 (+ ReLU): 3 whole-image matmuls (one per vertical tap).
    acc = jnp.dot(xp_ref[pl.ds(0, H), :], w3a_ref[0],
                  preferred_element_type=jnp.float32)
    acc = acc + jnp.dot(xp_ref[pl.ds(1, H), :], w3a_ref[1],
                        preferred_element_type=jnp.float32)
    acc = acc + jnp.dot(xp_ref[pl.ds(2, H), :], w3a_ref[2],
                        preferred_element_type=jnp.float32)
    h1 = jnp.maximum(acc + b3a_ref[...], 0.0)               # (H, W*c_out)

    zrow_o = jnp.zeros((1, WCo), jnp.float32)
    hp_ref[pl.ds(0, 1), :] = zrow_o
    hp_ref[pl.ds(H + 1, 1), :] = zrow_o
    hp_ref[pl.ds(1, H), :] = h1

    # conv3x3_2, accumulated on top of the residual branch.
    acc2 = jnp.dot(hp_ref[pl.ds(0, H), :], w3b_ref[0],
                   preferred_element_type=jnp.float32)
    acc2 = acc2 + jnp.dot(hp_ref[pl.ds(1, H), :], w3b_ref[1],
                          preferred_element_type=jnp.float32)
    acc2 = acc2 + jnp.dot(hp_ref[pl.ds(2, H), :], w3b_ref[2],
                          preferred_element_type=jnp.float32)
    out = res + acc2 + b3b_ref[...]                         # (H, W*c_out)

    # ---------------- output (+ optional 2x2 avg-pool) -----------------------
    # pool is linear: avg_pool(res) + avg_pool(h) == avg_pool(res + h).
    if apply_down:
      t = jnp.dot(ph_ref[...], out, preferred_element_type=jnp.float32)
      y_ref[...] = jnp.dot(t, pw_ref[...], preferred_element_type=jnp.float32)
    else:
      y_ref[...] = out

  return kernel


# ---------------------------------------------------------------------------
# Host-side weight restructuring (one-time parameter prep, not hot path)
# ---------------------------------------------------------------------------
def _banded_conv3x3_weights(w3, W):
  """(3,3,ci,co) HWIO -> (3, W*ci, W*co).

  For each vertical tap dy, M[dy] is a banded matrix such that
  out_rows = sum_dy padded_rows[dy:dy+H] @ M[dy] implements the 3x3 conv with
  padding=1; horizontal zero-padding is encoded by clipping the band."""
  _, _, ci, co = w3.shape
  m = np.zeros((3, W * ci, W * co), np.float32)
  for dy in range(3):
    for x in range(W):
      for dx in range(3):
        xs = x + dx - 1
        if 0 <= xs < W:
          m[dy, xs * ci:(xs + 1) * ci, x * co:(x + 1) * co] = w3[dy, dx]
  return m


# ---------------------------------------------------------------------------
# Wrapper (glue)
# ---------------------------------------------------------------------------
def dblock_pallas(x, params, *, apply_relu=True, apply_down=False):
  B, H, W, c_in = x.shape
  w1, b1, w3a, b3a, w3b, b3b = params
  c_out = np.asarray(w3a).shape[-1]
  use_1x1 = (c_in != c_out)
  if apply_down:
    assert H % 2 == 0 and W % 2 == 0, "avg-pool path requires even H, W"
  Ho, Wo = (H // 2, W // 2) if apply_down else (H, W)
  WCi, WCo = W * c_in, W * c_out

  # Restructured weights (numpy, done once per parameter set).
  w1m = np.kron(np.eye(W, dtype=np.float32),
                np.asarray(w1, np.float32))                    # (W*ci, W*co)
  b1row = np.tile(np.asarray(b1, np.float32).reshape(-1), W)[None, :]
  w3am = _banded_conv3x3_weights(np.asarray(w3a, np.float32), W)
  b3arow = np.tile(np.asarray(b3a, np.float32).reshape(-1), W)[None, :]
  w3bm = _banded_conv3x3_weights(np.asarray(w3b, np.float32), W)
  b3brow = np.tile(np.asarray(b3b, np.float32).reshape(-1), W)[None, :]

  x2d = x.reshape(B, H, WCi)        # lane-dense channel-minor view per image

  def full_spec(shape):
    return pl.BlockSpec(shape, lambda b: (0,) * len(shape))

  args = [x2d, jnp.asarray(w1m), jnp.asarray(b1row), jnp.asarray(w3am),
          jnp.asarray(b3arow), jnp.asarray(w3bm), jnp.asarray(b3brow)]
  in_specs = [
      pl.BlockSpec((None, H, WCi), lambda b: (b, 0, 0)),
      full_spec(w1m.shape), full_spec(b1row.shape),
      full_spec(w3am.shape), full_spec(b3arow.shape),
      full_spec(w3bm.shape), full_spec(b3brow.shape),
  ]

  if apply_down:
    ph = np.zeros((H // 2, H), np.float32)
    ph[np.arange(H) // 2, np.arange(H)] = 0.5                  # row-pair pool
    pw_small = np.zeros((W, W // 2), np.float32)
    pw_small[np.arange(W), np.arange(W) // 2] = 0.5            # col-pair pool
    pw = np.kron(pw_small, np.eye(c_out, dtype=np.float32))    # (W*co, Wo*co)
    args += [jnp.asarray(ph), jnp.asarray(pw)]
    in_specs += [full_spec(ph.shape), full_spec(pw.shape)]

  kernel = _make_dblock_kernel(H, W, c_in, c_out, apply_relu, apply_down,
                               use_1x1)

  out2d = pl.pallas_call(
      kernel,
      out_shape=jax.ShapeDtypeStruct((B, Ho, Wo * c_out), jnp.float32),
      grid_spec=pltpu.PrefetchScalarGridSpec(
          num_scalar_prefetch=0,
          grid=(B,),
          in_specs=in_specs,
          out_specs=pl.BlockSpec((None, Ho, Wo * c_out), lambda b: (b, 0, 0)),
          scratch_shapes=[
              pltpu.VMEM((H + 2, WCi), jnp.float32),   # vert-padded input rows
              pltpu.VMEM((H + 2, WCo), jnp.float32),   # vert-padded conv1 act
          ]),
      compiler_params=pltpu.CompilerParams(
          dimension_semantics=("parallel",)),          # batch elems independent
  )(*args)

  return out2d.reshape(B, Ho, Wo, c_out)


# ---------------------------------------------------------------------------
# Deterministic parameter setup (synthetic, spectral-normalized)
# ---------------------------------------------------------------------------
def _spectral_normalize(w):
  """Divide by the largest singular value of the (fan_in, c_out) matrix."""
  m = np.asarray(w).reshape(-1, np.asarray(w).shape[-1])
  sigma = np.float32(np.linalg.svd(m, compute_uv=False)[0])
  return (w / sigma).astype(jnp.float32)


def make_params(key, c_in, c_out):
  ks = jax.random.split(key, 6)
  w1 = _spectral_normalize(jax.random.normal(ks[0], (c_in, c_out), jnp.float32))
  b1 = 0.1 * jax.random.normal(ks[1], (1, c_out), jnp.float32)
  w3a = _spectral_normalize(
      jax.random.normal(ks[2], (3, 3, c_in, c_out), jnp.float32))
  b3a = 0.1 * jax.random.normal(ks[3], (1, c_out), jnp.float32)
  w3b = _spectral_normalize(
      jax.random.normal(ks[4], (3, 3, c_out, c_out), jnp.float32))
  b3b = 0.1 * jax.random.normal(ks[5], (1, c_out), jnp.float32)
  return (w1, b1, w3a, b3a, w3b, b3b)


# ---------------------------------------------------------------------------
# Pure-JAX reference (same semantics as the PyTorch forward, NHWC)
# ---------------------------------------------------------------------------
def _conv2d_nhwc(x, w, b, pad):
  y = lax.conv_general_dilated(
      x, w, window_strides=(1, 1), padding=((pad, pad), (pad, pad)),
      dimension_numbers=("NHWC", "HWIO", "NHWC"))
  return y + b.reshape(1, 1, 1, -1)


def _avg_pool2x2(x):
  B, H, W, C = x.shape
  return x.reshape(B, H // 2, 2, W // 2, 2, C).mean(axis=(2, 4))


def dblock_reference(x, params, *, apply_relu, apply_down):
  w1, b1, w3a, b3a, w3b, b3b = params
  c_in, c_out = x.shape[-1], w3a.shape[-1]
  if c_in != c_out:
    res = _conv2d_nhwc(x, w1[None, None], b1, 0)
  else:
    res = x
  if apply_down:
    res = _avg_pool2x2(res)
  h = jnp.maximum(x, 0.0) if apply_relu else x
  h = jnp.maximum(_conv2d_nhwc(h, w3a, b3a, 1), 0.0)
  h = _conv2d_nhwc(h, w3b, b3b, 1)
  if apply_down:
    h = _avg_pool2x2(h)
  return res + h


# ---------------------------------------------------------------------------
if __name__ == "__main__":
  key = jax.random.PRNGKey(0)
  B, H, W = 2, 16, 16

  configs = [
      # (c_in, c_out, apply_relu, apply_down)
      (4, 8, True, True),     # typical DBlock: 1x1 shortcut + downsample
      (8, 8, False, False),   # identity shortcut, no relu, no downsample
  ]

  for c_in, c_out, apply_relu, apply_down in configs:
    key, kx, kp = jax.random.split(key, 3)
    x = jax.random.normal(kx, (B, H, W, c_in), jnp.float32)
    params = make_params(kp, c_in, c_out)

    y = dblock_pallas(x, params, apply_relu=apply_relu, apply_down=apply_down)
    y = jax.block_until_ready(y)

    y_ref = dblock_reference(x, params, apply_relu=apply_relu,
                             apply_down=apply_down)
    np.testing.assert_allclose(np.asarray(y), np.asarray(y_ref),
                               rtol=2e-3, atol=2e-3)

  print("KERNEL_OK")
</pallas_src>

<mosaic_0001>
module attributes {stable_mosaic.version = 11 : i64} {
  func.func @kernel(%arg0: i32, %arg1: memref<1x16x64xf32, #tpu.memory_space<vmem>>, %arg2: memref<64x128xf32, #tpu.memory_space<vmem>>, %arg3: memref<1x128xf32, #tpu.memory_space<vmem>>, %arg4: memref<3x64x128xf32, #tpu.memory_space<vmem>>, %arg5: memref<1x128xf32, #tpu.memory_space<vmem>>, %arg6: memref<3x128x128xf32, #tpu.memory_space<vmem>>, %arg7: memref<1x128xf32, #tpu.memory_space<vmem>>, %arg8: memref<8x16xf32, #tpu.memory_space<vmem>>, %arg9: memref<128x64xf32, #tpu.memory_space<vmem>>, %arg10: memref<1x8x64xf32, #tpu.memory_space<vmem>>, %arg11: memref<18x64xf32, #tpu.memory_space<vmem>>, %arg12: memref<18x128xf32, #tpu.memory_space<vmem>>) attributes {dimension_semantics = [#tpu.dimension_semantics<parallel>], iteration_bounds = array<i64: 2>, scalar_prefetch = 0 : i64, scratch_operands = 2 : i64, tpu.core_type = #tpu.core_type<tc>, window_params = [{transform_indices = @transform_0, window_bounds = array<i64: 1, 16, 64>}, {pipeline_mode = #tpu.pipeline_mode<synchronous>, transform_indices = @transform_1, window_bounds = array<i64: 64, 128>}, {pipeline_mode = #tpu.pipeline_mode<synchronous>, transform_indices = @transform_2, window_bounds = array<i64: 1, 128>}, {pipeline_mode = #tpu.pipeline_mode<synchronous>, transform_indices = @transform_3, window_bounds = array<i64: 3, 64, 128>}, {pipeline_mode = #tpu.pipeline_mode<synchronous>, transform_indices = @transform_4, window_bounds = array<i64: 1, 128>}, {pipeline_mode = #tpu.pipeline_mode<synchronous>, transform_indices = @transform_5, window_bounds = array<i64: 3, 128, 128>}, {pipeline_mode = #tpu.pipeline_mode<synchronous>, transform_indices = @transform_6, window_bounds = array<i64: 1, 128>}, {pipeline_mode = #tpu.pipeline_mode<synchronous>, transform_indices = @transform_7, window_bounds = array<i64: 8, 16>}, {pipeline_mode = #tpu.pipeline_mode<synchronous>, transform_indices = @transform_8, window_bounds = array<i64: 128, 64>}, {transform_indices = @transform_9, window_bounds = array<i64: 1, 8, 64>}]} {
    %c0 = arith.constant 0 : index
    %c0_0 = arith.constant 0 : index
    %c0_1 = arith.constant 0 : index
    %0 = vector.load %arg1[%c0, %c0_0, %c0_1] : memref<1x16x64xf32, #tpu.memory_space<vmem>>, vector<1x16x64xf32>
    %1 = vector.shape_cast %0 : vector<1x16x64xf32> to vector<16x64xf32>
    %c0_2 = arith.constant 0 : index
    %c0_3 = arith.constant 0 : index
    %2 = vector.load %arg2[%c0_2, %c0_3] : memref<64x128xf32, #tpu.memory_space<vmem>>, vector<64x128xf32>
    %cst = arith.constant dense<0.000000e+00> : vector<16x128xf32>
    %3 = tpu.matmul %1, %2, %cst {dimension_numbers = #tpu.dot_dimension_numbers<[1], [0], [0], [1], [0, 0, 1, 1], [], []>} : vector<16x64xf32>, vector<64x128xf32>, vector<16x128xf32> -> vector<16x128xf32>
    %c0_4 = arith.constant 0 : index
    %c0_5 = arith.constant 0 : index
    %4 = vector.load %arg3[%c0_4, %c0_5] : memref<1x128xf32, #tpu.memory_space<vmem>>, vector<1x128xf32>
    %5 = vector.broadcast %4 : vector<1x128xf32> to vector<16x128xf32>
    %6 = arith.addf %3, %5 : vector<16x128xf32>
    %cst_6 = arith.constant 0.000000e+00 : f32
    %7 = vector.broadcast %cst_6 : f32 to vector<16x64xf32>
    %8 = arith.maximumf %1, %7 : vector<16x64xf32>
    %cst_7 = arith.constant 0.000000e+00 : f32
    %9 = vector.broadcast %cst_7 : f32 to vector<1x64xf32>
    %c0_8 = arith.constant 0 : index
    %c0_9 = arith.constant 0 : index
    %10 = vector.load %arg11[%c0_8, %c0_9] : memref<18x64xf32, #tpu.memory_space<vmem>>, vector<1x64xf32>
    tpu.vector_store %arg11[%c0_8, %c0_9], %9 {strides = array<i32>} : memref<18x64xf32, #tpu.memory_space<vmem>>, vector<1x64xf32>,
    %c17 = arith.constant 17 : index
    %c0_10 = arith.constant 0 : index
    %11 = vector.load %arg11[%c17, %c0_10] : memref<18x64xf32, #tpu.memory_space<vmem>>, vector<1x64xf32>
    tpu.vector_store %arg11[%c17, %c0_10], %9 {strides = array<i32>} : memref<18x64xf32, #tpu.memory_space<vmem>>, vector<1x64xf32>,
    %c1 = arith.constant 1 : index
    %c0_11 = arith.constant 0 : index
    %12 = vector.load %arg11[%c1, %c0_11] : memref<18x64xf32, #tpu.memory_space<vmem>>, vector<16x64xf32>
    tpu.vector_store %arg11[%c1, %c0_11], %8 {strides = array<i32>} : memref<18x64xf32, #tpu.memory_space<vmem>>, vector<16x64xf32>,
    %c0_12 = arith.constant 0 : index
    %c0_13 = arith.constant 0 : index
    %13 = vector.load %arg11[%c0_12, %c0_13] : memref<18x64xf32, #tpu.memory_space<vmem>>, vector<16x64xf32>
    %c0_14 = arith.constant 0 : index
    %c0_15 = arith.constant 0 : index
    %c0_16 = arith.constant 0 : index
    %14 = vector.load %arg4[%c0_14, %c0_15, %c0_16] : memref<3x64x128xf32, #tpu.memory_space<vmem>>, vector<1x64x128xf32>
    %15 = vector.shape_cast %14 : vector<1x64x128xf32> to vector<64x128xf32>
    %cst_17 = arith.constant dense<0.000000e+00> : vector<16x128xf32>
    %16 = tpu.matmul %13, %15, %cst_17 {dimension_numbers = #tpu.dot_dimension_numbers<[1], [0], [0], [1], [0, 0, 1, 1], [], []>} : vector<16x64xf32>, vector<64x128xf32>, vector<16x128xf32> -> vector<16x128xf32>
    %c1_18 = arith.constant 1 : index
    %c0_19 = arith.constant 0 : index
    %17 = vector.load %arg11[%c1_18, %c0_19] : memref<18x64xf32, #tpu.memory_space<vmem>>, vector<16x64xf32>
    %c1_20 = arith.constant 1 : index
    %c0_21 = arith.constant 0 : index
    %c0_22 = arith.constant 0 : index
    %18 = vector.load %arg4[%c1_20, %c0_21, %c0_22] : memref<3x64x128xf32, #tpu.memory_space<vmem>>, vector<1x64x128xf32>
    %19 = vector.shape_cast %18 : vector<1x64x128xf32> to vector<64x128xf32>
    %cst_23 = arith.constant dense<0.000000e+00> : vector<16x128xf32>
    %20 = tpu.matmul %17, %19, %cst_23 {dimension_numbers = #tpu.dot_dimension_numbers<[1], [0], [0], [1], [0, 0, 1, 1], [], []>} : vector<16x64xf32>, vector<64x128xf32>, vector<16x128xf32> -> vector<16x128xf32>
    %21 = arith.addf %16, %20 : vector<16x128xf32>
    %c2 = arith.constant 2 : index
    %c0_24 = arith.constant 0 : index
    %22 = vector.load %arg11[%c2, %c0_24] : memref<18x64xf32, #tpu.memory_space<vmem>>, vector<16x64xf32>
    %c2_25 = arith.constant 2 : index
    %c0_26 = arith.constant 0 : index
    %c0_27 = arith.constant 0 : index
    %23 = vector.load %arg4[%c2_25, %c0_26, %c0_27] : memref<3x64x128xf32, #tpu.memory_space<vmem>>, vector<1x64x128xf32>
    %24 = vector.shape_cast %23 : vector<1x64x128xf32> to vector<64x128xf32>
    %cst_28 = arith.constant dense<0.000000e+00> : vector<16x128xf32>
    %25 = tpu.matmul %22, %24, %cst_28 {dimension_numbers = #tpu.dot_dimension_numbers<[1], [0], [0], [1], [0, 0, 1, 1], [], []>} : vector<16x64xf32>, vector<64x128xf32>, vector<16x128xf32> -> vector<16x128xf32>
    %26 = arith.addf %21, %25 : vector<16x128xf32>
    %c0_29 = arith.constant 0 : index
    %c0_30 = arith.constant 0 : index
    %27 = vector.load %arg5[%c0_29, %c0_30] : memref<1x128xf32, #tpu.memory_space<vmem>>, vector<1x128xf32>
    %28 = vector.broadcast %27 : vector<1x128xf32> to vector<16x128xf32>
    %29 = arith.addf %26, %28 : vector<16x128xf32>
    %cst_31 = arith.constant 0.000000e+00 : f32
    %30 = vector.broadcast %cst_31 : f32 to vector<16x128xf32>
    %31 = arith.maximumf %29, %30 : vector<16x128xf32>
    %cst_32 = arith.constant 0.000000e+00 : f32
    %32 = vector.broadcast %cst_32 : f32 to vector<1x128xf32>
    %c0_33 = arith.constant 0 : index
    %c0_34 = arith.constant 0 : index
    %33 = vector.load %arg12[%c0_33, %c0_34] : memref<18x128xf32, #tpu.memory_space<vmem>>, vector<1x128xf32>
    tpu.vector_store %arg12[%c0_33, %c0_34], %32 {strides = array<i32>} : memref<18x128xf32, #tpu.memory_space<vmem>>, vector<1x128xf32>,
    %c17_35 = arith.constant 17 : index
    %c0_36 = arith.constant 0 : index
    %34 = vector.load %arg12[%c17_35, %c0_36] : memref<18x128xf32, #tpu.memory_space<vmem>>, vector<1x128xf32>
    tpu.vector_store %arg12[%c17_35, %c0_36], %32 {strides = array<i32>} : memref<18x128xf32, #tpu.memory_space<vmem>>, vector<1x128xf32>,
    %c1_37 = arith.constant 1 : index
    %c0_38 = arith.constant 0 : index
    %35 = vector.load %arg12[%c1_37, %c0_38] : memref<18x128xf32, #tpu.memory_space<vmem>>, vector<16x128xf32>
    tpu.vector_store %arg12[%c1_37, %c0_38], %31 {strides = array<i32>} : memref<18x128xf32, #tpu.memory_space<vmem>>, vector<16x128xf32>,
    %c0_39 = arith.constant 0 : index
    %c0_40 = arith.constant 0 : index
    %36 = vector.load %arg12[%c0_39, %c0_40] : memref<18x128xf32, #tpu.memory_space<vmem>>, vector<16x128xf32>
    %c0_41 = arith.constant 0 : index
    %c0_42 = arith.constant 0 : index
    %c0_43 = arith.constant 0 : index
    %37 = vector.load %arg6[%c0_41, %c0_42, %c0_43] : memref<3x128x128xf32, #tpu.memory_space<vmem>>, vector<1x128x128xf32>
    %38 = vector.shape_cast %37 : vector<1x128x128xf32> to vector<128x128xf32>
    %cst_44 = arith.constant dense<0.000000e+00> : vector<16x128xf32>
    %39 = tpu.matmul %36, %38, %cst_44 {dimension_numbers = #tpu.dot_dimension_numbers<[1], [0], [0], [1], [0, 0, 1, 1], [], []>} : vector<16x128xf32>, vector<128x128xf32>, vector<16x128xf32> -> vector<16x128xf32>
    %c1_45 = arith.constant 1 : index
    %c0_46 = arith.constant 0 : index
    %40 = vector.load %arg12[%c1_45, %c0_46] : memref<18x128xf32, #tpu.memory_space<vmem>>, vector<16x128xf32>
    %c1_47 = arith.constant 1 : index
    %c0_48 = arith.constant 0 : index
    %c0_49 = arith.constant 0 : index
    %41 = vector.load %arg6[%c1_47, %c0_48, %c0_49] : memref<3x128x128xf32, #tpu.memory_space<vmem>>, vector<1x128x128xf32>
    %42 = vector.shape_cast %41 : vector<1x128x128xf32> to vector<128x128xf32>
    %cst_50 = arith.constant dense<0.000000e+00> : vector<16x128xf32>
    %43 = tpu.matmul %40, %42, %cst_50 {dimension_numbers = #tpu.dot_dimension_numbers<[1], [0], [0], [1], [0, 0, 1, 1], [], []>} : vector<16x128xf32>, vector<128x128xf32>, vector<16x128xf32> -> vector<16x128xf32>
    %44 = arith.addf %39, %43 : vector<16x128xf32>
    %c2_51 = arith.constant 2 : index
    %c0_52 = arith.constant 0 : index
    %45 = vector.load %arg12[%c2_51, %c0_52] : memref<18x128xf32, #tpu.memory_space<vmem>>, vector<16x128xf32>
    %c2_53 = arith.constant 2 : index
    %c0_54 = arith.constant 0 : index
    %c0_55 = arith.constant 0 : index
    %46 = vector.load %arg6[%c2_53, %c0_54, %c0_55] : memref<3x128x128xf32, #tpu.memory_space<vmem>>, vector<1x128x128xf32>
    %47 = vector.shape_cast %46 : vector<1x128x128xf32> to vector<128x128xf32>
    %cst_56 = arith.constant dense<0.000000e+00> : vector<16x128xf32>
    %48 = tpu.matmul %45, %47, %cst_56 {dimension_numbers = #tpu.dot_dimension_numbers<[1], [0], [0], [1], [0, 0, 1, 1], [], []>} : vector<16x128xf32>, vector<128x128xf32>, vector<16x128xf32> -> vector<16x128xf32>
    %49 = arith.addf %44, %48 : vector<16x128xf32>
    %50 = arith.addf %6, %49 : vector<16x128xf32>
    %c0_57 = arith.constant 0 : index
    %c0_58 = arith.constant 0 : index
    %51 = vector.load %arg7[%c0_57, %c0_58] : memref<1x128xf32, #tpu.memory_space<vmem>>, vector<1x128xf32>
    %52 = vector.broadcast %51 : vector<1x128xf32> to vector<16x128xf32>
    %53 = arith.addf %50, %52 : vector<16x128xf32>
    %c0_59 = arith.constant 0 : index
    %c0_60 = arith.constant 0 : index
    %54 = vector.load %arg8[%c0_59, %c0_60] : memref<8x16xf32, #tpu.memory_space<vmem>>, vector<8x16xf32>
    %cst_61 = arith.constant dense<0.000000e+00> : vector<8x128xf32>
    %55 = tpu.matmul %54, %53, %cst_61 {dimension_numbers = #tpu.dot_dimension_numbers<[1], [0], [0], [1], [0, 0, 1, 1], [], []>} : vector<8x16xf32>, vector<16x128xf32>, vector<8x128xf32> -> vector<8x128xf32>
    %c0_62 = arith.constant 0 : index
    %c0_63 = arith.constant 0 : index
    %56 = vector.load %arg9[%c0_62, %c0_63] : memref<128x64xf32, #tpu.memory_space<vmem>>, vector<128x64xf32>
    %cst_64 = arith.constant dense<0.000000e+00> : vector<8x64xf32>
    %57 = tpu.matmul %55, %56, %cst_64 {dimension_numbers = #tpu.dot_dimension_numbers<[1], [0], [0], [1], [0, 0, 1, 1], [], []>} : vector<8x128xf32>, vector<128x64xf32>, vector<8x64xf32> -> vector<8x64xf32>
    %c0_65 = arith.constant 0 : index
    %c0_66 = arith.constant 0 : index
    %c0_67 = arith.constant 0 : index
    %58 = vector.load %arg10[%c0_65, %c0_66, %c0_67] : memref<1x8x64xf32, #tpu.memory_space<vmem>>, vector<1x8x64xf32>
    %59 = vector.shape_cast %58 : vector<1x8x64xf32> to vector<8x64xf32>
    %60 = vector.shape_cast %57 : vector<8x64xf32> to vector<1x8x64xf32>
    tpu.vector_store %arg10[%c0_65, %c0_66, %c0_67], %60 {strides = array<i32>} : memref<1x8x64xf32, #tpu.memory_space<vmem>>, vector<1x8x64xf32>,
    return
  }
  func.func @transform_0(%arg0: i32) -> (i32, i32, i32) {
    %c0_i32 = arith.constant 0 : i32
    %c0_i32_0 = arith.constant 0 : i32
    %c0_i32_1 = arith.constant 0 : i32
    return %arg0, %c0_i32, %c0_i32_0 : i32, i32, i32
  }
  func.func @transform_1(%arg0: i32) -> (i32, i32) {
    %c0_i32 = arith.constant 0 : i32
    %c0_i32_0 = arith.constant 0 : i32
    %c0_i32_1 = arith.constant 0 : i32
    return %c0_i32, %c0_i32_0 : i32, i32
  }
  func.func @transform_2(%arg0: i32) -> (i32, i32) {
    %c0_i32 = arith.constant 0 : i32
    %c0_i32_0 = arith.constant 0 : i32
    %c0_i32_1 = arith.constant 0 : i32
    return %c0_i32, %c0_i32_0 : i32, i32
  }
  func.func @transform_3(%arg0: i32) -> (i32, i32, i32) {
    %c0_i32 = arith.constant 0 : i32
    %c0_i32_0 = arith.constant 0 : i32
    %c0_i32_1 = arith.constant 0 : i32
    %c0_i32_2 = arith.constant 0 : i32
    return %c0_i32, %c0_i32_0, %c0_i32_1 : i32, i32, i32
  }
  func.func @transform_4(%arg0: i32) -> (i32, i32) {
    %c0_i32 = arith.constant 0 : i32
    %c0_i32_0 = arith.constant 0 : i32
    %c0_i32_1 = arith.constant 0 : i32
    return %c0_i32, %c0_i32_0 : i32, i32
  }
  func.func @transform_5(%arg0: i32) -> (i32, i32, i32) {
    %c0_i32 = arith.constant 0 : i32
    %c0_i32_0 = arith.constant 0 : i32
    %c0_i32_1 = arith.constant 0 : i32
    %c0_i32_2 = arith.constant 0 : i32
    return %c0_i32, %c0_i32_0, %c0_i32_1 : i32, i32, i32
  }
  func.func @transform_6(%arg0: i32) -> (i32, i32) {
    %c0_i32 = arith.constant 0 : i32
    %c0_i32_0 = arith.constant 0 : i32
    %c0_i32_1 = arith.constant 0 : i32
    return %c0_i32, %c0_i32_0 : i32, i32
  }
  func.func @transform_7(%arg0: i32) -> (i32, i32) {
    %c0_i32 = arith.constant 0 : i32
    %c0_i32_0 = arith.constant 0 : i32
    %c0_i32_1 = arith.constant 0 : i32
    return %c0_i32, %c0_i32_0 : i32, i32
  }
  func.func @transform_8(%arg0: i32) -> (i32, i32) {
    %c0_i32 = arith.constant 0 : i32
    %c0_i32_0 = arith.constant 0 : i32
    %c0_i32_1 = arith.constant 0 : i32
    return %c0_i32, %c0_i32_0 : i32, i32
  }
  func.func @transform_9(%arg0: i32) -> (i32, i32, i32) {
    %c0_i32 = arith.constant 0 : i32
    %c0_i32_0 = arith.constant 0 : i32
    %c0_i32_1 = arith.constant 0 : i32
    return %arg0, %c0_i32, %c0_i32_0 : i32, i32, i32
  }
}

</mosaic_0001>

<llo_original>
// kernel: tpu_custom_call.1
$region0: #{tpu_custom_call.1}
  #allocation0 [shape = 'u32[]', space=smem, size = 0x4, offset = 0x4, fixed_abs, tag = 'smem constant byte address 0x4 - core index']
  #allocation1 [shape = 'u32[144,128]{1,0:T(1,128)}', space=vmem, size = 0x12000, scoped, tag = 'internal scratch']
  #allocation2 [shape = 'f32[18,64]{1,0:T(8,128)}', space=vmem, size = 0x3000, scoped, tag = 'scratch operand']
  #allocation3 [shape = 'f32[18,128]{1,0:T(8,128)}', space=vmem, size = 0x3000, scoped, tag = 'scratch operand']
  %s0 = inlined_call_operand.hbm [shape: f32[2,16,64], index: 0, kind: input, shape index: {}]
  %s1 = inlined_call_operand.hbm [shape: f32[64,128], index: 1, kind: input, shape index: {}]
  %s2 = inlined_call_operand.vmem [shape: f32[1,128], index: 2, kind: input, shape index: {}]
  %s3 = inlined_call_operand.vmem [shape: f32[3,64,128], index: 3, kind: input, shape index: {}]
  %s4 = inlined_call_operand.vmem [shape: f32[1,128], index: 4, kind: input, shape index: {}]
  %s5 = inlined_call_operand.hbm [shape: f32[3,128,128], index: 5, kind: input, shape index: {}]
  %s6 = inlined_call_operand.hbm [shape: f32[1,128], index: 6, kind: input, shape index: {}]
  %s7 = inlined_call_operand.vmem [shape: f32[8,16], index: 7, kind: input, shape index: {}]
  %s8 = inlined_call_operand.vmem [shape: f32[128,64], index: 8, kind: input, shape index: {}]
  %s9 = inlined_call_operand.hbm [shape: f32[2,8,64], index: 9, kind: output, shape index: {}]
  %s10 = sld [smem:[#allocation0]]
  $region85: #{tpu_custom_call.1} parent=0
    _
  %s12 = ssub.s32 1, %s10
  %s13 = scalar_select 0, %s12, %s10
  $region1: #{tpu_custom_call.1} parent=0
    #allocation4 [shape = 'u8[16384]{0}', space=vmem, size = 0x4000, scoped, tag = 'input window, operand 0']
    #allocation5 [shape = 's32[2]{0}', space=sflag, size = 0x8, scoped, tag = 'scoped memory for tpu_custom_call.1']
    #allocation6 [shape = 's32[2]{0}', space=sflag, size = 0x8, scoped, tag = 'scoped memory for tpu_custom_call.1']
    #allocation7 [shape = 'u8[32768]{0}', space=vmem, size = 0x8000, scoped, tag = 'input window, operand 1, single buffered']
    #allocation8 [shape = 's32[1]{0}', space=sflag, size = 0x4, scoped, tag = 'scoped memory for tpu_custom_call.1']
    #allocation9 [shape = 'u8[196608]{0}', space=vmem, size = 0x30000, scoped, tag = 'input window, operand 5, single buffered']
    #allocation10 [shape = 'u8[512]{0}', space=vmem, size = 0x400, scoped, tag = 'input window, operand 6, single buffered']
    #allocation11 [shape = 's32[1]{0}', space=sflag, size = 0x4, scoped, tag = 'scoped memory for tpu_custom_call.1']
    #allocation12 [shape = 'u8[8192]{0}', space=vmem, size = 0x2000, scoped, tag = 'output window, operand 0']
    %14 = vsyncpa [#allocation5], 0
    %s15 = scalar_lea.sflag [#allocation5], 1
    %16 = vsyncpa %s15, 0
    %17 = vsyncpa [#allocation8], 0
    %18 = vsyncpa [#allocation11], 0
    %19 = vsyncpa [#allocation6], 0
    %s20 = scalar_lea.sflag [#allocation6], 1
    %21 = vsyncpa %s20, 0
    loop: start=0, step=1, limit=4
    $region2: #{tpu_custom_call.1} parent=1 // loop_pre_header
      _
    $region3: #{tpu_custom_call.1} parent=1 // loop_header
      %s23 = sphi 0, %s27
      %p24 = scmp.ge.s32.totalorder %s23, 4
      %s33 = sphi 0, %s35
      %s36 = sphi 0, %s33
      %s37 = sphi 0, %s36
      %s53 = sphi 0, %s37
      %s57 = sphi 0, %s57
      %s59 = sphi 0, %s57
      %s60 = sphi 0, %s59
      %s74 = sphi 0, %s60
      %s78 = sphi 0, %s78
      %s80 = sphi 0, %s78
      %s81 = sphi 0, %s80
      %s95 = sphi 0, %s81
      %s99 = sphi 0, %s99
      %s101 = sphi 0, %s99
      %s102 = sphi 0, %s101
      %s116 = sphi 0, %s102
      %s120 = sphi 0, %s120
      %s122 = sphi 0, %s120
      %s123 = sphi 0, %s122
      %s137 = sphi 0, %s123
      %s141 = sphi 0, %s141
      %s143 = sphi 0, %s141
      %s144 = sphi 0, %s143
      %s158 = sphi 0, %s144
      %s162 = sphi 0, %s162
      %s164 = sphi 0, %s162
      %s165 = sphi 0, %s164
      %s179 = sphi 0, %s165
      %s183 = sphi 0, %s183
      %s185 = sphi 0, %s183
      %s186 = sphi 0, %s185
      %s200 = sphi 0, %s186
      %s204 = sphi 0, %s204
      %s206 = sphi 0, %s204
      %s207 = sphi 0, %s206
      %s221 = sphi 0, %s207
      %s227 = sphi 0, %s229
      %s230 = sphi 0, %s227
      %s231 = sphi 0, %s230
      %s247 = sphi 0, %s231
    $region4: #{tpu_custom_call.1} parent=1 // loop_header_branch
      %26 = sbr.rel (%p24) target = $region8
    $region5: #{tpu_custom_call.1} parent=1 // loop_body
      %s28 = ssub.s32 %s23, 1
      %s29 = ssub.s32 %s23, 2
      %s30 = sadd.s32 %s23, 1
      %s31 = ssub.s32 %s23, %s30
      %p32 = scmp.eq.s32.totalorder %s31, 0
      %s34 = sadd.s32 %s33, 1
      %s35 = scalar_select %p32, %s33, %s34
      %p38 = pneg %p32
      %p39 = scmp.eq.s32.totalorder %s23, 1
      %p40 = por %p38, %p39
      %p41 = scmp.ne.s32.totalorder %s33, %s36
      %p42 = scmp.eq.s32.totalorder %s23, 0
      %p43 = por %p41, %p42
      %p44 = scmp.ne.s32.totalorder %s33, %s36
      %p45 = scmp.eq.s32.totalorder %s28, 1
      %p46 = por %p44, %p45
      %p47 = scmp.ne.s32.totalorder %s36, %s37
      %p48 = scmp.eq.s32.totalorder %s28, 0
      %p49 = por %p47, %p48
      %p50 = scmp.ne.s32.totalorder %s36, %s37
      %p51 = scmp.eq.s32.totalorder %s29, 1
      %p52 = por %p50, %p51
      %p54 = scmp.ne.s32.totalorder %s37, %s53
      %p55 = scmp.eq.s32.totalorder %s29, 0
      %p56 = por %p54, %p55
      %s58 = sadd.s32 %s57, 1
      %p61 = scmp.eq.s32.totalorder %s23, 1
      %p62 = scmp.ne.s32.totalorder %s57, %s59
      %p63 = scmp.eq.s32.totalorder %s23, 0
      %p64 = por %p62, %p63
      %p65 = scmp.ne.s32.totalorder %s57, %s59
      %p66 = scmp.eq.s32.totalorder %s28, 1
      %p67 = por %p65, %p66
      %p68 = scmp.ne.s32.totalorder %s59, %s60
      %p69 = scmp.eq.s32.totalorder %s28, 0
      %p70 = por %p68, %p69
      %p71 = scmp.ne.s32.totalorder %s59, %s60
      %p72 = scmp.eq.s32.totalorder %s29, 1
      %p73 = por %p71, %p72
      %p75 = scmp.ne.s32.totalorder %s60, %s74
      %p76 = scmp.eq.s32.totalorder %s29, 0
      %p77 = por %p75, %p76
      %s79 = sadd.s32 %s78, 1
      %p82 = scmp.eq.s32.totalorder %s23, 1
      %p83 = scmp.ne.s32.totalorder %s78, %s80
      %p84 = scmp.eq.s32.totalorder %s23, 0
      %p85 = por %p83, %p84
      %p86 = scmp.ne.s32.totalorder %s78, %s80
      %p87 = scmp.eq.s32.totalorder %s28, 1
      %p88 = por %p86, %p87
      %p89 = scmp.ne.s32.totalorder %s80, %s81
      %p90 = scmp.eq.s32.totalorder %s28, 0
      %p91 = por %p89, %p90
      %p92 = scmp.ne.s32.totalorder %s80, %s81
      %p93 = scmp.eq.s32.totalorder %s29, 1
      %p94 = por %p92, %p93
      %p96 = scmp.ne.s32.totalorder %s81, %s95
      %p97 = scmp.eq.s32.totalorder %s29, 0
      %p98 = por %p96, %p97
      %s100 = sadd.s32 %s99, 1
      %p103 = scmp.eq.s32.totalorder %s23, 1
      %p104 = scmp.ne.s32.totalorder %s99, %s101
      %p105 = scmp.eq.s32.totalorder %s23, 0
      %p106 = por %p104, %p105
      %p107 = scmp.ne.s32.totalorder %s99, %s101
      %p108 = scmp.eq.s32.totalorder %s28, 1
      %p109 = por %p107, %p108
      %p110 = scmp.ne.s32.totalorder %s101, %s102
      %p111 = scmp.eq.s32.totalorder %s28, 0
      %p112 = por %p110, %p111
      %p113 = scmp.ne.s32.totalorder %s101, %s102
      %p114 = scmp.eq.s32.totalorder %s29, 1
      %p115 = por %p113, %p114
      %p117 = scmp.ne.s32.totalorder %s102, %s116
      %p118 = scmp.eq.s32.totalorder %s29, 0
      %p119 = por %p117, %p118
      %s121 = sadd.s32 %s120, 1
      %p124 = scmp.eq.s32.totalorder %s23, 1
      %p125 = scmp.ne.s32.totalorder %s120, %s122
      %p126 = scmp.eq.s32.totalorder %s23, 0
      %p127 = por %p125, %p126
      %p128 = scmp.ne.s32.totalorder %s120, %s122
      %p129 = scmp.eq.s32.totalorder %s28, 1
      %p130 = por %p128, %p129
      %p131 = scmp.ne.s32.totalorder %s122, %s123
      %p132 = scmp.eq.s32.totalorder %s28, 0
      %p133 = por %p131, %p132
      %p134 = scmp.ne.s32.totalorder %s122, %s123
      %p135 = scmp.eq.s32.totalorder %s29, 1
      %p136 = por %p134, %p135
      %p138 = scmp.ne.s32.totalorder %s123, %s137
      %p139 = scmp.eq.s32.totalorder %s29, 0
      %p140 = por %p138, %p139
      %s142 = sadd.s32 %s141, 1
      %p145 = scmp.eq.s32.totalorder %s23, 1
      %p146 = scmp.ne.s32.totalorder %s141, %s143
      %p147 = scmp.eq.s32.totalorder %s23, 0
      %p148 = por %p146, %p147
      %p149 = scmp.ne.s32.totalorder %s141, %s143
      %p150 = scmp.eq.s32.totalorder %s28, 1
      %p151 = por %p149, %p150
      %p152 = scmp.ne.s32.totalorder %s143, %s144
      %p153 = scmp.eq.s32.totalorder %s28, 0
      %p154 = por %p152, %p153
      %p155 = scmp.ne.s32.totalorder %s143, %s144
      %p156 = scmp.eq.s32.totalorder %s29, 1
      %p157 = por %p155, %p156
      %p159 = scmp.ne.s32.totalorder %s144, %s158
      %p160 = scmp.eq.s32.totalorder %s29, 0
      %p161 = por %p159, %p160
      %s163 = sadd.s32 %s162, 1
      %p166 = scmp.eq.s32.totalorder %s23, 1
      %p167 = scmp.ne.s32.totalorder %s162, %s164
      %p168 = scmp.eq.s32.totalorder %s23, 0
      %p169 = por %p167, %p168
      %p170 = scmp.ne.s32.totalorder %s162, %s164
      %p171 = scmp.eq.s32.totalorder %s28, 1
      %p172 = por %p170, %p171
      %p173 = scmp.ne.s32.totalorder %s164, %s165
      %p174 = scmp.eq.s32.totalorder %s28, 0
      %p175 = por %p173, %p174
      %p176 = scmp.ne.s32.totalorder %s164, %s165
      %p177 = scmp.eq.s32.totalorder %s29, 1
      %p178 = por %p176, %p177
      %p180 = scmp.ne.s32.totalorder %s165, %s179
      %p181 = scmp.eq.s32.totalorder %s29, 0
      %p182 = por %p180, %p181
      %s184 = sadd.s32 %s183, 1
      %p187 = scmp.eq.s32.totalorder %s23, 1
      %p188 = scmp.ne.s32.totalorder %s183, %s185
      %p189 = scmp.eq.s32.totalorder %s23, 0
      %p190 = por %p188, %p189
      %p191 = scmp.ne.s32.totalorder %s183, %s185
      %p192 = scmp.eq.s32.totalorder %s28, 1
      %p193 = por %p191, %p192
      %p194 = scmp.ne.s32.totalorder %s185, %s186
      %p195 = scmp.eq.s32.totalorder %s28, 0
      %p196 = por %p194, %p195
      %p197 = scmp.ne.s32.totalorder %s185, %s186
      %p198 = scmp.eq.s32.totalorder %s29, 1
      %p199 = por %p197, %p198
      %p201 = scmp.ne.s32.totalorder %s186, %s200
      %p202 = scmp.eq.s32.totalorder %s29, 0
      %p203 = por %p201, %p202
      %s205 = sadd.s32 %s204, 1
      %p208 = scmp.eq.s32.totalorder %s23, 1
      %p209 = scmp.ne.s32.totalorder %s204, %s206
      %p210 = scmp.eq.s32.totalorder %s23, 0
      %p211 = por %p209, %p210
      %p212 = scmp.ne.s32.totalorder %s204, %s206
      %p213 = scmp.eq.s32.totalorder %s28, 1
      %p214 = por %p212, %p213
      %p215 = scmp.ne.s32.totalorder %s206, %s207
      %p216 = scmp.eq.s32.totalorder %s28, 0
      %p217 = por %p215, %p216
      %p218 = scmp.ne.s32.totalorder %s206, %s207
      %p219 = scmp.eq.s32.totalorder %s29, 1
      %p220 = por %p218, %p219
      %p222 = scmp.ne.s32.totalorder %s207, %s221
      %p223 = scmp.eq.s32.totalorder %s29, 0
      %p224 = por %p222, %p223
      %s225 = ssub.s32 %s23, %s30
      %p226 = scmp.eq.s32.totalorder %s225, 0
      %s228 = sadd.s32 %s227, 1
      %s229 = scalar_select %p226, %s227, %s228
      %p232 = pneg %p226
      %p233 = scmp.eq.s32.totalorder %s23, 1
      %p234 = por %p232, %p233
      %p235 = scmp.ne.s32.totalorder %s227, %s230
      %p236 = scmp.eq.s32.totalorder %s23, 0
      %p237 = por %p235, %p236
      %p238 = scmp.ne.s32.totalorder %s227, %s230
      %p239 = scmp.eq.s32.totalorder %s28, 1
      %p240 = por %p238, %p239
      %p241 = scmp.ne.s32.totalorder %s230, %s231
      %p242 = scmp.eq.s32.totalorder %s28, 0
      %p243 = por %p241, %p242
      %p244 = scmp.ne.s32.totalorder %s230, %s231
      %p245 = scmp.eq.s32.totalorder %s29, 1
      %p246 = por %p244, %p245
      %p248 = scmp.ne.s32.totalorder %s231, %s247
      %p249 = scmp.eq.s32.totalorder %s29, 0
      %p250 = por %p248, %p249
      %p251 = scmp.le.s32.totalorder 1, %s23
      %p252 = scmp.lt.s32.totalorder %s23, 3
      %p253 = pnand %p251, %p252
      %p254 = pneg %p253
      // Predicated region
      $region9: #{tpu_custom_call.1} parent=5 // pred_check
        _
      $region10: #{tpu_custom_call.1} parent=5 // pred_check_branch
        %256 = sbr.rel (%p253) target = $region12
      $region11: #{tpu_custom_call.1} parent=5 // pred_region
        %s257 = ssub.s32 %s23, 1
        // Predicated region
        $region13: #{tpu_custom_call.1} parent=11 // pred_check
          %p258 = pneg %p70
        $region14: #{tpu_custom_call.1} parent=11 // pred_check_branch
          %260 = sbr.rel (%p258) target = $region16
        $region15: #{tpu_custom_call.1} parent=11 // pred_region
          %s262 = ssub.s32 1024, 1024
          %263 = vsyncadd [#allocation8], %s262
          %s264 = sshll.u32 [#allocation7], 4
          %s265 = int_to_ptr.vmem [resolvable:$true] %s264
          %270 = dma.hbm_to_vmem [thread:$0]  %s1, 1024, %s265, [#allocation8], 128, 128, 8
        $region16: #{tpu_custom_call.1} parent=11 // pred_fallthru
          _
        // Predicated region
        $region17: #{tpu_custom_call.1} parent=11 // pred_check
          %p271 = pneg %p91
        $region18: #{tpu_custom_call.1} parent=11 // pred_check_branch
          %273 = sbr.rel (%p271) target = $region20
        $region19: #{tpu_custom_call.1} parent=11 // pred_region
          _
        $region20: #{tpu_custom_call.1} parent=11 // pred_fallthru
          _
        // Predicated region
        $region21: #{tpu_custom_call.1} parent=11 // pred_check
          %p274 = pneg %p112
        $region22: #{tpu_custom_call.1} parent=11 // pred_check_branch
          %276 = sbr.rel (%p274) target = $region24
        $region23: #{tpu_custom_call.1} parent=11 // pred_region
          _
        $region24: #{tpu_custom_call.1} parent=11 // pred_fallthru
          _
        // Predicated region
        $region25: #{tpu_custom_call.1} parent=11 // pred_check
          %p277 = pneg %p133
        $region26: #{tpu_custom_call.1} parent=11 // pred_check_branch
          %279 = sbr.rel (%p277) target = $region28
        $region27: #{tpu_custom_call.1} parent=11 // pred_region
          _
        $region28: #{tpu_custom_call.1} parent=11 // pred_fallthru
          _
        // Predicated region
        $region29: #{tpu_custom_call.1} parent=11 // pred_check
          %p280 = pneg %p154
        $region30: #{tpu_custom_call.1} parent=11 // pred_check_branch
          %282 = sbr.rel (%p280) target = $region32
        $region31: #{tpu_custom_call.1} parent=11 // pred_region
          %s284 = ssub.s32 6144, 6144
          %285 = vsyncadd [#allocation8], %s284
          %s286 = sshll.u32 [#allocation9], 4
          %s287 = int_to_ptr.vmem [resolvable:$true] %s286
          %292 = dma.hbm_to_vmem [thread:$0]  %s5, 6144, %s287, [#allocation8], 128, 128, 8
        $region32: #{tpu_custom_call.1} parent=11 // pred_fallthru
          _
        // Predicated region
        $region33: #{tpu_custom_call.1} parent=11 // pred_check
          %p293 = pneg %p175
        $region34: #{tpu_custom_call.1} parent=11 // pred_check_branch
          %295 = sbr.rel (%p293) target = $region36
        $region35: #{tpu_custom_call.1} parent=11 // pred_region
          %s297 = ssub.s32 16, 16
          %298 = vsyncadd [#allocation11], %s297
          %s300 = sshll.u32 [#allocation10], 4
          %s301 = int_to_ptr.vmem [resolvable:$true] %s300
          %303 = dma.hbm_to_vmem [thread:$0]  %s6, 16, %s301, [#allocation11]
        $region36: #{tpu_custom_call.1} parent=11 // pred_fallthru
          _
        // Predicated region
        $region37: #{tpu_custom_call.1} parent=11 // pred_check
          %p304 = pneg %p196
        $region38: #{tpu_custom_call.1} parent=11 // pred_check_branch
          %306 = sbr.rel (%p304) target = $region40
        $region39: #{tpu_custom_call.1} parent=11 // pred_region
          _
        $region40: #{tpu_custom_call.1} parent=11 // pred_fallthru
          _
        // Predicated region
        $region41: #{tpu_custom_call.1} parent=11 // pred_check
          %p307 = pneg %p217
        $region42: #{tpu_custom_call.1} parent=11 // pred_check_branch
          %309 = sbr.rel (%p307) target = $region44
        $region43: #{tpu_custom_call.1} parent=11 // pred_region
          _
        $region44: #{tpu_custom_call.1} parent=11 // pred_fallthru
          _
      $region12: #{tpu_custom_call.1} parent=5 // pred_fallthru
        _
      %p310 = scmp.lt.s32.totalorder %s23, 2
      // Predicated region
      $region45: #{tpu_custom_call.1} parent=5 // pred_check
        %p311 = pneg %p310
      $region46: #{tpu_custom_call.1} parent=5 // pred_check_branch
        %313 = sbr.rel (%p311) target = $region48
      $region47: #{tpu_custom_call.1} parent=5 // pred_region
        // Predicated region
        $region49: #{tpu_custom_call.1} parent=47 // pred_check
          %p314 = pneg %p43
        $region50: #{tpu_custom_call.1} parent=47 // pred_check_branch
          %316 = sbr.rel (%p314) target = $region52
        $region51: #{tpu_custom_call.1} parent=47 // pred_region
          %s317 = sand.u32 %s33, 1
          %s318 = scalar_lea.sflag [#allocation5], %s317
          %s319 = sand.u32 %s33, 1
          %s320 = smul.addr %s319, 16
          %s321 = scalar_lea.vmem [#allocation4], %s320
          %s323 = ssub.s32 256, 256
          %324 = vsyncadd %s318, %s323
          %s325 = smul.addr %s23, 2
          %s326 = smul.addr %s325, 128
          %s327 = scalar_lea.hbm %s0, %s326
          %s328 = sshll.u32 %s321, 4
          %s329 = int_to_ptr.vmem [resolvable:$true] %s328
          %334 = dma.hbm_to_vmem [thread:$0]  %s327, 256, %s329, %s318, 128, 128, 8
        $region52: #{tpu_custom_call.1} parent=47 // pred_fallthru
          _
      $region48: #{tpu_custom_call.1} parent=5 // pred_fallthru
        _
      %p335 = scmp.le.s32.totalorder 1, %s23
      %p336 = scmp.lt.s32.totalorder %s23, 3
      %p337 = pnand %p335, %p336
      %p338 = pneg %p337
      // Predicated region
      $region53: #{tpu_custom_call.1} parent=5 // pred_check
        _
      $region54: #{tpu_custom_call.1} parent=5 // pred_check_branch
        %340 = sbr.rel (%p337) target = $region56
      $region55: #{tpu_custom_call.1} parent=5 // pred_region
        %s341 = ssub.s32 %s23, 1
        %s342 = sand.u32 %s36, 1
        %s343 = scalar_lea.sflag [#allocation5], %s342
        %s344 = sand.u32 %s36, 1
        %s345 = smul.addr %s344, 16
        %s346 = scalar_lea.vmem [#allocation4], %s345
        // Predicated region
        $region57: #{tpu_custom_call.1} parent=55 // pred_check
          %p347 = pneg %p49
        $region58: #{tpu_custom_call.1} parent=55 // pred_check_branch
          %349 = sbr.rel (%p347) target = $region60
        $region59: #{tpu_custom_call.1} parent=55 // pred_region
          %350 = dma.done %s343, 256
        $region60: #{tpu_custom_call.1} parent=55 // pred_fallthru
          _
        // Predicated region
        $region61: #{tpu_custom_call.1} parent=55 // pred_check
          %p351 = pneg %p70
        $region62: #{tpu_custom_call.1} parent=55 // pred_check_branch
          %353 = sbr.rel (%p351) target = $region64
        $region63: #{tpu_custom_call.1} parent=55 // pred_region
          %354 = dma.done [#allocation8], 1024
        $region64: #{tpu_custom_call.1} parent=55 // pred_fallthru
          _
        // Predicated region
        $region65: #{tpu_custom_call.1} parent=55 // pred_check
          %p355 = pneg %p154
        $region66: #{tpu_custom_call.1} parent=55 // pred_check_branch
          %357 = sbr.rel (%p355) target = $region68
        $region67: #{tpu_custom_call.1} parent=55 // pred_region
          %358 = dma.done [#allocation8], 6144
        $region68: #{tpu_custom_call.1} parent=55 // pred_fallthru
          _
        // Predicated region
        $region69: #{tpu_custom_call.1} parent=55 // pred_check
          %p359 = pneg %p175
        $region70: #{tpu_custom_call.1} parent=55 // pred_check_branch
          %361 = sbr.rel (%p359) target = $region72
        $region71: #{tpu_custom_call.1} parent=55 // pred_region
          %362 = dma.done [#allocation11], 16
        $region72: #{tpu_custom_call.1} parent=55 // pred_fallthru
          _
        %s363 = sand.u32 %s36, 1
        %s364 = scalar_lea.sflag [#allocation5], %s363
        %s365 = sand.u32 %s36, 1
        %s366 = smul.addr %s365, 16
        %s367 = scalar_lea.vmem [#allocation4], %s366
        %p368 = pneg %p49
        %p369 = pneg %p46
        %p370 = pneg %p70
        %p371 = pneg %p67
        %p372 = pneg %p91
        %p373 = pneg %p88
        %p374 = pneg %p112
        %p375 = pneg %p109
        %p376 = pneg %p133
        %p377 = pneg %p130
        %p378 = pneg %p154
        %p379 = pneg %p151
        %p380 = pneg %p175
        %p381 = pneg %p172
        %p382 = pneg %p196
        %p383 = pneg %p193
        %p384 = pneg %p217
        %p385 = pneg %p214
        %p386 = pneg %p243
        %p387 = pneg %p240
        %s388 = sand.u32 %s230, 1
        %s389 = scalar_lea.sflag [#allocation6], %s388
        %s390 = sand.u32 %s230, 1
        %s391 = smul.addr %s390, 8
        %s392 = scalar_lea.vmem [#allocation12], %s391
        %v393 = vld [vmem:[%s346] sm:$0xff]
        %v394 = vld [vmem:[%s346 + $0x8] sm:$0xff]
        %v395 = vld [vmem:[#allocation7] sm:$0xff]
        %v396 = vld [vmem:[#allocation7 + $0x8] sm:$0xff]
        %v397 = vld [vmem:[#allocation7 + $0x10] sm:$0xff]
        %v398 = vld [vmem:[#allocation7 + $0x18] sm:$0xff]
        %v399 = vld [vmem:[#allocation7 + $0x20] sm:$0xff]
        %v400 = vld [vmem:[#allocation7 + $0x28] sm:$0xff]
        %v401 = vld [vmem:[#allocation7 + $0x30] sm:$0xff]
        %v402 = vld [vmem:[#allocation7 + $0x38] sm:$0xff]
        %v403 = vld [vmem:[%s2] sm:$0x1]
        %v405 = vlaneseq
        %v406 = vshrl.u32 %v405, 7
        %v407 = vsub.s32 0, %v406
        %v408 = vrot.slane %v403, %v407
        %vm410 = vcmask 523264
        %v412 = vsel %vm410, %v393, 0
        %v415 = vsel %vm410, %v394, 0
        %417 = vmatprep.subr.mxu0 0.0
        %418 = vmatpush1.msra.mxu0 0.0
        %419 = vmatprep.subr.mxu0 0.0
        %420 = vmatpush1.msra.mxu0 0.0
        %421 = vmatprep.subr.mxu0 0.0
        %422 = vmatpush1.msra.mxu0 0.0
        %423 = vmatprep.subr.mxu0 0.0
        %424 = vmatpush1.msra.mxu0 0.0
        %425 = vmatprep.subr.mxu0 0.0
        %426 = vmatpush1.msra.mxu0 0.0
        %427 = vmatprep.subr.mxu0 0.0
        %428 = vmatpush1.msra.mxu0 0.0
        %429 = vmatprep.subr.mxu0 0.0
        %430 = vmatpush1.msra.mxu0 0.0
        %431 = vmatprep.subr.mxu0 0.0
        %432 = vmatpush1.msra.mxu0 0.0
        %433 = vmatprep.subr.mxu0 0.0
        %434 = vmatpush1.msra.mxu0 %v402
        %435 = vmatprep.subr.mxu0 0.0
        %436 = vmatpush1.msra.mxu0 %v401
        %437 = vmatprep.subr.mxu0 0.0
        %438 = vmatpush1.msra.mxu0 %v400
        %439 = vmatprep.subr.mxu0 0.0
        %440 = vmatpush1.msra.mxu0 %v399
        %441 = vmatprep.subr.mxu0 0.0
        %442 = vmatpush1.msra.mxu0 %v398
        %443 = vmatprep.subr.mxu0 0.0
        %444 = vmatpush1.msra.mxu0 %v397
        %445 = vmatprep.subr.mxu0 0.0
        %446 = vmatpush1.msra.mxu0 %v396
        %447 = vmatprep.subr.mxu0 0.0
        %448 = vmatpush1.msra.mxu0 %v395
        %449 = vmatprep.subr.mxu0 0.0
        %450 = vmatpush2.msra.mxu0 0.0
        %451 = vmatprep.subr.mxu0 0.0
        %452 = vmatpush2.msra.mxu0 0.0
        %453 = vmatprep.subr.mxu0 0.0
        %454 = vmatpush2.msra.mxu0 0.0
        %455 = vmatprep.subr.mxu0 0.0
        %456 = vmatpush2.msra.mxu0 0.0
        %457 = vmatprep.subr.mxu0 0.0
        %458 = vmatpush2.msra.mxu0 0.0
        %459 = vmatprep.subr.mxu0 0.0
        %460 = vmatpush2.msra.mxu0 0.0
        %461 = vmatprep.subr.mxu0 0.0
        %462 = vmatpush2.msra.mxu0 0.0
        %463 = vmatprep.subr.mxu0 0.0
        %464 = vmatpush2.msra.mxu0 0.0
        %465 = vmatprep.subr.mxu0 0.0
        %466 = vmatpush2.msra.mxu0 0.0
        %467 = vmatprep.subr.mxu0 0.0
        %468 = vmatpush2.msra.mxu0 0.0
        %469 = vmatprep.subr.mxu0 0.0
        %470 = vmatpush2.msra.mxu0 0.0
        %471 = vmatprep.subr.mxu0 0.0
        %472 = vmatpush2.msra.mxu0 0.0
        %473 = vmatprep.subr.mxu0 0.0
        %474 = vmatpush2.msra.mxu0 0.0
        %475 = vmatprep.subr.mxu0 0.0
        %476 = vmatpush2.msra.mxu0 0.0
        %477 = vmatprep.subr.mxu0 0.0
        %478 = vmatpush2.msra.mxu0 0.0
        %479 = vmatprep.subr.mxu0 0.0
        %480 = vmatpush2.msra.mxu0 0.0
        %481 = vmatprep.mubr.f32.mxu0 0.0
        %482 = vmatmul.mubr.f32.gmra.mxu0 %v412
        %v483 = vpop.f32.mrf.mxu0
        %v484 = vadd.f32 %v408, %v483
        %v485 = vpop.f32.mrf.mxu0
        %486 = vmatprep.mubr.f32.mxu0 0.0
        %487 = vmatmul.mubr.f32.gmra.mxu0 %v415
        %v488 = vpop.f32.mrf.mxu0
        %v489 = vadd.f32 %v408, %v488
        %v490 = vpop.f32.mrf.mxu0
        %491 = vdwg.mxu0
        %v492 = vmax.f32 %v393, 0.0
        %v493 = vmax.f32 %v394, 0.0
        %vm494 = vcmask 516096
        %495 = vst.msk [vmem:[#allocation2] sm:$0x1] %vm494, 0.0
        %496 = vst.msk [vmem:[#allocation2 + $0x11] sm:$0x1] %vm494, 0.0
        %497 = vst.msk [vmem:[#allocation2 + $0x1] sm:$0xff] %vm410, %v492
        %498 = vst.msk [vmem:[#allocation2 + $0x9] sm:$0xff] %vm410, %v493
        %v499 = vld [vmem:[#allocation2] sm:$0xff]
        %v500 = vld [vmem:[#allocation2 + $0x8] sm:$0xff]
        %v501 = vld [vmem:[%s3] sm:$0xff]
        %v502 = vld [vmem:[%s3 + $0x8] sm:$0xff]
        %v503 = vld [vmem:[%s3 + $0x10] sm:$0xff]
        %v504 = vld [vmem:[%s3 + $0x18] sm:$0xff]
        %v505 = vld [vmem:[%s3 + $0x20] sm:$0xff]
        %v506 = vld [vmem:[%s3 + $0x28] sm:$0xff]
        %v507 = vld [vmem:[%s3 + $0x30] sm:$0xff]
        %v508 = vld [vmem:[%s3 + $0x38] sm:$0xff]
        %v509 = vld [vmem:[#allocation2 + $0x1] sm:$0xff]
        %v510 = vld [vmem:[#allocation2 + $0x9] sm:$0xff]
        %s511 = scalar_lea.vmem %s3, 64
        %v512 = vld [vmem:[%s511] sm:$0xff]
        %v513 = vld [vmem:[%s511 + $0x8] sm:$0xff]
        %v514 = vld [vmem:[%s511 + $0x10] sm:$0xff]
        %v515 = vld [vmem:[%s511 + $0x18] sm:$0xff]
        %v516 = vld [vmem:[%s511 + $0x20] sm:$0xff]
        %v517 = vld [vmem:[%s511 + $0x28] sm:$0xff]
        %v518 = vld [vmem:[%s511 + $0x30] sm:$0xff]
        %v519 = vld [vmem:[%s511 + $0x38] sm:$0xff]
        %v521 = vsel %vm410, %v509, 0
        %v524 = vsel %vm410, %v510, 0
        %526 = vmatprep.subr.mxu0 0.0
        %527 = vmatpush1.msra.mxu0 0.0
        %528 = vmatprep.subr.mxu0 0.0
        %529 = vmatpush1.msra.mxu0 0.0
        %530 = vmatprep.subr.mxu0 0.0
        %531 = vmatpush1.msra.mxu0 0.0
        %532 = vmatprep.subr.mxu0 0.0
        %533 = vmatpush1.msra.mxu0 0.0
        %534 = vmatprep.subr.mxu0 0.0
        %535 = vmatpush1.msra.mxu0 0.0
        %536 = vmatprep.subr.mxu0 0.0
        %537 = vmatpush1.msra.mxu0 0.0
        %538 = vmatprep.subr.mxu0 0.0
        %539 = vmatpush1.msra.mxu0 0.0
        %540 = vmatprep.subr.mxu0 0.0
        %541 = vmatpush1.msra.mxu0 0.0
        %542 = vmatprep.subr.mxu0 0.0
        %543 = vmatpush1.msra.mxu0 %v519
        %544 = vmatprep.subr.mxu0 0.0
        %545 = vmatpush1.msra.mxu0 %v518
        %546 = vmatprep.subr.mxu0 0.0
        %547 = vmatpush1.msra.mxu0 %v517
        %548 = vmatprep.subr.mxu0 0.0
        %549 = vmatpush1.msra.mxu0 %v516
        %550 = vmatprep.subr.mxu0 0.0
        %551 = vmatpush1.msra.mxu0 %v515
        %552 = vmatprep.subr.mxu0 0.0
        %553 = vmatpush1.msra.mxu0 %v514
        %554 = vmatprep.subr.mxu0 0.0
        %555 = vmatpush1.msra.mxu0 %v513
        %556 = vmatprep.subr.mxu0 0.0
        %557 = vmatpush1.msra.mxu0 %v512
        %558 = vmatprep.subr.mxu0 0.0
        %559 = vmatpush2.msra.mxu0 0.0
        %560 = vmatprep.subr.mxu0 0.0
        %561 = vmatpush2.msra.mxu0 0.0
        %562 = vmatprep.subr.mxu0 0.0
        %563 = vmatpush2.msra.mxu0 0.0
        %564 = vmatprep.subr.mxu0 0.0
        %565 = vmatpush2.msra.mxu0 0.0
        %566 = vmatprep.subr.mxu0 0.0
        %567 = vmatpush2.msra.mxu0 0.0
        %568 = vmatprep.subr.mxu0 0.0
        %569 = vmatpush2.msra.mxu0 0.0
        %570 = vmatprep.subr.mxu0 0.0
        %571 = vmatpush2.msra.mxu0 0.0
        %572 = vmatprep.subr.mxu0 0.0
        %573 = vmatpush2.msra.mxu0 0.0
        %574 = vmatprep.subr.mxu0 0.0
        %575 = vmatpush2.msra.mxu0 0.0
        %576 = vmatprep.subr.mxu0 0.0
        %577 = vmatpush2.msra.mxu0 0.0
        %578 = vmatprep.subr.mxu0 0.0
        %579 = vmatpush2.msra.mxu0 0.0
        %580 = vmatprep.subr.mxu0 0.0
        %581 = vmatpush2.msra.mxu0 0.0
        %582 = vmatprep.subr.mxu0 0.0
        %583 = vmatpush2.msra.mxu0 0.0
        %584 = vmatprep.subr.mxu0 0.0
        %585 = vmatpush2.msra.mxu0 0.0
        %586 = vmatprep.subr.mxu0 0.0
        %587 = vmatpush2.msra.mxu0 0.0
        %588 = vmatprep.subr.mxu0 0.0
        %589 = vmatpush2.msra.mxu0 0.0
        %590 = vmatprep.mubr.f32.mxu0 0.0
        %591 = vmatmul.mubr.f32.gmra.mxu0 %v521
        %v592 = vpop.f32.mrf.mxu0
        %v593 = vadd.f32 0.0, %v592
        %v594 = vpop.f32.mrf.mxu0
        %595 = vmatprep.mubr.f32.mxu0 0.0
        %596 = vmatmul.mubr.f32.gmra.mxu0 %v524
        %v597 = vpop.f32.mrf.mxu0
        %v598 = vadd.f32 0.0, %v597
        %v599 = vpop.f32.mrf.mxu0
        %600 = vdwg.mxu0
        %v602 = vsel %vm410, %v499, 0
        %v605 = vsel %vm410, %v500, 0
        %607 = vmatprep.subr.mxu0 0.0
        %608 = vmatpush1.msra.mxu0 0.0
        %609 = vmatprep.subr.mxu0 0.0
        %610 = vmatpush1.msra.mxu0 0.0
        %611 = vmatprep.subr.mxu0 0.0
        %612 = vmatpush1.msra.mxu0 0.0
        %613 = vmatprep.subr.mxu0 0.0
        %614 = vmatpush1.msra.mxu0 0.0
        %615 = vmatprep.subr.mxu0 0.0
        %616 = vmatpush1.msra.mxu0 0.0
        %617 = vmatprep.subr.mxu0 0.0
        %618 = vmatpush1.msra.mxu0 0.0
        %619 = vmatprep.subr.mxu0 0.0
        %620 = vmatpush1.msra.mxu0 0.0
        %621 = vmatprep.subr.mxu0 0.0
        %622 = vmatpush1.msra.mxu0 0.0
        %623 = vmatprep.subr.mxu0 0.0
        %624 = vmatpush1.msra.mxu0 %v508
        %625 = vmatprep.subr.mxu0 0.0
        %626 = vmatpush1.msra.mxu0 %v507
        %627 = vmatprep.subr.mxu0 0.0
        %628 = vmatpush1.msra.mxu0 %v506
        %629 = vmatprep.subr.mxu0 0.0
        %630 = vmatpush1.msra.mxu0 %v505
        %631 = vmatprep.subr.mxu0 0.0
        %632 = vmatpush1.msra.mxu0 %v504
        %633 = vmatprep.subr.mxu0 0.0
        %634 = vmatpush1.msra.mxu0 %v503
        %635 = vmatprep.subr.mxu0 0.0
        %636 = vmatpush1.msra.mxu0 %v502
        %637 = vmatprep.subr.mxu0 0.0
        %638 = vmatpush1.msra.mxu0 %v501
        %639 = vmatprep.subr.mxu0 0.0
        %640 = vmatpush2.msra.mxu0 0.0
        %641 = vmatprep.subr.mxu0 0.0
        %642 = vmatpush2.msra.mxu0 0.0
        %643 = vmatprep.subr.mxu0 0.0
        %644 = vmatpush2.msra.mxu0 0.0
        %645 = vmatprep.subr.mxu0 0.0
        %646 = vmatpush2.msra.mxu0 0.0
        %647 = vmatprep.subr.mxu0 0.0
        %648 = vmatpush2.msra.mxu0 0.0
        %649 = vmatprep.subr.mxu0 0.0
        %650 = vmatpush2.msra.mxu0 0.0
        %651 = vmatprep.subr.mxu0 0.0
        %652 = vmatpush2.msra.mxu0 0.0
        %653 = vmatprep.subr.mxu0 0.0
        %654 = vmatpush2.msra.mxu0 0.0
        %655 = vmatprep.subr.mxu0 0.0
        %656 = vmatpush2.msra.mxu0 0.0
        %657 = vmatprep.subr.mxu0 0.0
        %658 = vmatpush2.msra.mxu0 0.0
        %659 = vmatprep.subr.mxu0 0.0
        %660 = vmatpush2.msra.mxu0 0.0
        %661 = vmatprep.subr.mxu0 0.0
        %662 = vmatpush2.msra.mxu0 0.0
        %663 = vmatprep.subr.mxu0 0.0
        %664 = vmatpush2.msra.mxu0 0.0
        %665 = vmatprep.subr.mxu0 0.0
        %666 = vmatpush2.msra.mxu0 0.0
        %667 = vmatprep.subr.mxu0 0.0
        %668 = vmatpush2.msra.mxu0 0.0
        %669 = vmatprep.subr.mxu0 0.0
        %670 = vmatpush2.msra.mxu0 0.0
        %671 = vmatprep.mubr.f32.mxu0 0.0
        %672 = vmatmul.mubr.f32.gmra.mxu0 %v602
        %v673 = vpop.f32.mrf.mxu0
        %v674 = vadd.f32 %v593, %v673
        %v675 = vpop.f32.mrf.mxu0
        %676 = vmatprep.mubr.f32.mxu0 0.0
        %677 = vmatmul.mubr.f32.gmra.mxu0 %v605
        %v678 = vpop.f32.mrf.mxu0
        %v679 = vadd.f32 %v598, %v678
        %v680 = vpop.f32.mrf.mxu0
        %681 = vdwg.mxu0
        %v682 = vld [vmem:[#allocation2 + $0x2] sm:$0xff]
        %v683 = vld [vmem:[#allocation2 + $0xa] sm:$0xff]
        %s684 = scalar_lea.vmem %s3, 128
        %v685 = vld [vmem:[%s684] sm:$0xff]
        %v686 = vld [vmem:[%s684 + $0x8] sm:$0xff]
        %v687 = vld [vmem:[%s684 + $0x10] sm:$0xff]
        %v688 = vld [vmem:[%s684 + $0x18] sm:$0xff]
        %v689 = vld [vmem:[%s684 + $0x20] sm:$0xff]
        %v690 = vld [vmem:[%s684 + $0x28] sm:$0xff]
        %v691 = vld [vmem:[%s684 + $0x30] sm:$0xff]
        %v692 = vld [vmem:[%s684 + $0x38] sm:$0xff]
        %v694 = vsel %vm410, %v682, 0
        %v697 = vsel %vm410, %v683, 0
        %699 = vmatprep.subr.mxu0 0.0
        %700 = vmatpush1.msra.mxu0 0.0
        %701 = vmatprep.subr.mxu0 0.0
        %702 = vmatpush1.msra.mxu0 0.0
        %703 = vmatprep.subr.mxu0 0.0
        %704 = vmatpush1.msra.mxu0 0.0
        %705 = vmatprep.subr.mxu0 0.0
        %706 = vmatpush1.msra.mxu0 0.0
        %707 = vmatprep.subr.mxu0 0.0
        %708 = vmatpush1.msra.mxu0 0.0
        %709 = vmatprep.subr.mxu0 0.0
        %710 = vmatpush1.msra.mxu0 0.0
        %711 = vmatprep.subr.mxu0 0.0
        %712 = vmatpush1.msra.mxu0 0.0
        %713 = vmatprep.subr.mxu0 0.0
        %714 = vmatpush1.msra.mxu0 0.0
        %715 = vmatprep.subr.mxu0 0.0
        %716 = vmatpush1.msra.mxu0 %v692
        %717 = vmatprep.subr.mxu0 0.0
        %718 = vmatpush1.msra.mxu0 %v691
        %719 = vmatprep.subr.mxu0 0.0
        %720 = vmatpush1.msra.mxu0 %v690
        %721 = vmatprep.subr.mxu0 0.0
        %722 = vmatpush1.msra.mxu0 %v689
        %723 = vmatprep.subr.mxu0 0.0
        %724 = vmatpush1.msra.mxu0 %v688
        %725 = vmatprep.subr.mxu0 0.0
        %726 = vmatpush1.msra.mxu0 %v687
        %727 = vmatprep.subr.mxu0 0.0
        %728 = vmatpush1.msra.mxu0 %v686
        %729 = vmatprep.subr.mxu0 0.0
        %730 = vmatpush1.msra.mxu0 %v685
        %731 = vmatprep.subr.mxu0 0.0
        %732 = vmatpush2.msra.mxu0 0.0
        %733 = vmatprep.subr.mxu0 0.0
        %734 = vmatpush2.msra.mxu0 0.0
        %735 = vmatprep.subr.mxu0 0.0
        %736 = vmatpush2.msra.mxu0 0.0
        %737 = vmatprep.subr.mxu0 0.0
        %738 = vmatpush2.msra.mxu0 0.0
        %739 = vmatprep.subr.mxu0 0.0
        %740 = vmatpush2.msra.mxu0 0.0
        %741 = vmatprep.subr.mxu0 0.0
        %742 = vmatpush2.msra.mxu0 0.0
        %743 = vmatprep.subr.mxu0 0.0
        %744 = vmatpush2.msra.mxu0 0.0
        %745 = vmatprep.subr.mxu0 0.0
        %746 = vmatpush2.msra.mxu0 0.0
        %747 = vmatprep.subr.mxu0 0.0
        %748 = vmatpush2.msra.mxu0 0.0
        %749 = vmatprep.subr.mxu0 0.0
        %750 = vmatpush2.msra.mxu0 0.0
        %751 = vmatprep.subr.mxu0 0.0
        %752 = vmatpush2.msra.mxu0 0.0
        %753 = vmatprep.subr.mxu0 0.0
        %754 = vmatpush2.msra.mxu0 0.0
        %755 = vmatprep.subr.mxu0 0.0
        %756 = vmatpush2.msra.mxu0 0.0
        %757 = vmatprep.subr.mxu0 0.0
        %758 = vmatpush2.msra.mxu0 0.0
        %759 = vmatprep.subr.mxu0 0.0
        %760 = vmatpush2.msra.mxu0 0.0
        %761 = vmatprep.subr.mxu0 0.0
        %762 = vmatpush2.msra.mxu0 0.0
        %763 = vmatprep.mubr.f32.mxu0 0.0
        %764 = vmatmul.mubr.f32.gmra.mxu0 %v694
        %v765 = vpop.f32.mrf.mxu0
        %v766 = vadd.f32 0.0, %v765
        %v767 = vpop.f32.mrf.mxu0
        %768 = vmatprep.mubr.f32.mxu0 0.0
        %769 = vmatmul.mubr.f32.gmra.mxu0 %v697
        %v770 = vpop.f32.mrf.mxu0
        %v771 = vadd.f32 0.0, %v770
        %v772 = vpop.f32.mrf.mxu0
        %773 = vdwg.mxu0
        %v774 = vadd.f32 %v674, %v766
        %v775 = vadd.f32 %v679, %v771
        %v776 = vld [vmem:[%s4] sm:$0x1]
        %v778 = vlaneseq
        %v779 = vshrl.u32 %v778, 7
        %v780 = vsub.s32 0, %v779
        %v781 = vrot.slane %v776, %v780
        %v783 = vadd.f32 %v774, %v781
        %v784 = vadd.f32 %v775, %v781
        %v785 = vmax.f32 %v783, 0.0
        %v786 = vmax.f32 %v784, 0.0
        %787 = vst [vmem:[#allocation3] sm:$0x1] 0.0
        %788 = vst [vmem:[#allocation3 + $0x11] sm:$0x1] 0.0
        %789 = vst [vmem:[#allocation3 + $0x1] sm:$0xff] %v785
        %790 = vst [vmem:[#allocation3 + $0x9] sm:$0xff] %v786
        %v791 = vld [vmem:[#allocation3] sm:$0xff]
        %v792 = vld [vmem:[#allocation3 + $0x8] sm:$0xff]
        %v793 = vld [vmem:[#allocation9] sm:$0xff]
        %v794 = vld [vmem:[#allocation9 + $0x8] sm:$0xff]
        %v795 = vld [vmem:[#allocation9 + $0x10] sm:$0xff]
        %v796 = vld [vmem:[#allocation9 + $0x18] sm:$0xff]
        %v797 = vld [vmem:[#allocation9 + $0x20] sm:$0xff]
        %v798 = vld [vmem:[#allocation9 + $0x28] sm:$0xff]
        %v799 = vld [vmem:[#allocation9 + $0x30] sm:$0xff]
        %v800 = vld [vmem:[#allocation9 + $0x38] sm:$0xff]
        %v801 = vld [vmem:[#allocation9 + $0x40] sm:$0xff]
        %v802 = vld [vmem:[#allocation9 + $0x48] sm:$0xff]
        %v803 = vld [vmem:[#allocation9 + $0x50] sm:$0xff]
        %v804 = vld [vmem:[#allocation9 + $0x58] sm:$0xff]
        %v805 = vld [vmem:[#allocation9 + $0x60] sm:$0xff]
        %v806 = vld [vmem:[#allocation9 + $0x68] sm:$0xff]
        %v807 = vld [vmem:[#allocation9 + $0x70] sm:$0xff]
        %v808 = vld [vmem:[#allocation9 + $0x78] sm:$0xff]
        %v809 = vld [vmem:[#allocation3 + $0x1] sm:$0xff]
        %v810 = vld [vmem:[#allocation3 + $0x9] sm:$0xff]
        %s811 = scalar_lea.vmem [#allocation9], 128
        %v812 = vld [vmem:[%s811] sm:$0xff]
        %v813 = vld [vmem:[%s811 + $0x8] sm:$0xff]
        %v814 = vld [vmem:[%s811 + $0x10] sm:$0xff]
        %v815 = vld [vmem:[%s811 + $0x18] sm:$0xff]
        %v816 = vld [vmem:[%s811 + $0x20] sm:$0xff]
        %v817 = vld [vmem:[%s811 + $0x28] sm:$0xff]
        %v818 = vld [vmem:[%s811 + $0x30] sm:$0xff]
        %v819 = vld [vmem:[%s811 + $0x38] sm:$0xff]
        %v820 = vld [vmem:[%s811 + $0x40] sm:$0xff]
        %v821 = vld [vmem:[%s811 + $0x48] sm:$0xff]
        %v822 = vld [vmem:[%s811 + $0x50] sm:$0xff]
        %v823 = vld [vmem:[%s811 + $0x58] sm:$0xff]
        %v824 = vld [vmem:[%s811 + $0x60] sm:$0xff]
        %v825 = vld [vmem:[%s811 + $0x68] sm:$0xff]
        %v826 = vld [vmem:[%s811 + $0x70] sm:$0xff]
        %v827 = vld [vmem:[%s811 + $0x78] sm:$0xff]
        %828 = vmatprep.subr.mxu0 0.0
        %829 = vmatpush1.msra.mxu0 %v827
        %830 = vmatprep.subr.mxu0 0.0
        %831 = vmatpush1.msra.mxu0 %v826
        %832 = vmatprep.subr.mxu0 0.0
        %833 = vmatpush1.msra.mxu0 %v825
        %834 = vmatprep.subr.mxu0 0.0
        %835 = vmatpush1.msra.mxu0 %v824
        %836 = vmatprep.subr.mxu0 0.0
        %837 = vmatpush1.msra.mxu0 %v823
        %838 = vmatprep.subr.mxu0 0.0
        %839 = vmatpush1.msra.mxu0 %v822
        %840 = vmatprep.subr.mxu0 0.0
        %841 = vmatpush1.msra.mxu0 %v821
        %842 = vmatprep.subr.mxu0 0.0
        %843 = vmatpush1.msra.mxu0 %v820
        %844 = vmatprep.subr.mxu0 0.0
        %845 = vmatpush1.msra.mxu0 %v819
        %846 = vmatprep.subr.mxu0 0.0
        %847 = vmatpush1.msra.mxu0 %v818
        %848 = vmatprep.subr.mxu0 0.0
        %849 = vmatpush1.msra.mxu0 %v817
        %850 = vmatprep.subr.mxu0 0.0
        %851 = vmatpush1.msra.mxu0 %v816
        %852 = vmatprep.subr.mxu0 0.0
        %853 = vmatpush1.msra.mxu0 %v815
        %854 = vmatprep.subr.mxu0 0.0
        %855 = vmatpush1.msra.mxu0 %v814
        %856 = vmatprep.subr.mxu0 0.0
        %857 = vmatpush1.msra.mxu0 %v813
        %858 = vmatprep.subr.mxu0 0.0
        %859 = vmatpush1.msra.mxu0 %v812
        %860 = vmatprep.subr.mxu0 0.0
        %861 = vmatpush2.msra.mxu0 0.0
        %862 = vmatprep.subr.mxu0 0.0
        %863 = vmatpush2.msra.mxu0 0.0
        %864 = vmatprep.subr.mxu0 0.0
        %865 = vmatpush2.msra.mxu0 0.0
        %866 = vmatprep.subr.mxu0 0.0
        %867 = vmatpush2.msra.mxu0 0.0
        %868 = vmatprep.subr.mxu0 0.0
        %869 = vmatpush2.msra.mxu0 0.0
        %870 = vmatprep.subr.mxu0 0.0
        %871 = vmatpush2.msra.mxu0 0.0
        %872 = vmatprep.subr.mxu0 0.0
        %873 = vmatpush2.msra.mxu0 0.0
        %874 = vmatprep.subr.mxu0 0.0
        %875 = vmatpush2.msra.mxu0 0.0
        %876 = vmatprep.subr.mxu0 0.0
        %877 = vmatpush2.msra.mxu0 0.0
        %878 = vmatprep.subr.mxu0 0.0
        %879 = vmatpush2.msra.mxu0 0.0
        %880 = vmatprep.subr.mxu0 0.0
        %881 = vmatpush2.msra.mxu0 0.0
        %882 = vmatprep.subr.mxu0 0.0
        %883 = vmatpush2.msra.mxu0 0.0
        %884 = vmatprep.subr.mxu0 0.0
        %885 = vmatpush2.msra.mxu0 0.0
        %886 = vmatprep.subr.mxu0 0.0
        %887 = vmatpush2.msra.mxu0 0.0
        %888 = vmatprep.subr.mxu0 0.0
        %889 = vmatpush2.msra.mxu0 0.0
        %890 = vmatprep.subr.mxu0 0.0
        %891 = vmatpush2.msra.mxu0 0.0
        %892 = vmatprep.mubr.f32.mxu0 0.0
        %893 = vmatmul.mubr.f32.gmra.mxu0 %v809
        %v894 = vpop.f32.mrf.mxu0
        %v895 = vadd.f32 0.0, %v894
        %v896 = vpop.f32.mrf.mxu0
        %897 = vmatprep.mubr.f32.mxu0 0.0
        %898 = vmatmul.mubr.f32.gmra.mxu0 %v810
        %v899 = vpop.f32.mrf.mxu0
        %v900 = vadd.f32 0.0, %v899
        %v901 = vpop.f32.mrf.mxu0
        %902 = vdwg.mxu0
        %903 = vmatprep.subr.mxu0 0.0
        %904 = vmatpush1.msra.mxu0 %v808
        %905 = vmatprep.subr.mxu0 0.0
        %906 = vmatpush1.msra.mxu0 %v807
        %907 = vmatprep.subr.mxu0 0.0
        %908 = vmatpush1.msra.mxu0 %v806
        %909 = vmatprep.subr.mxu0 0.0
        %910 = vmatpush1.msra.mxu0 %v805
        %911 = vmatprep.subr.mxu0 0.0
        %912 = vmatpush1.msra.mxu0 %v804
        %913 = vmatprep.subr.mxu0 0.0
        %914 = vmatpush1.msra.mxu0 %v803
        %915 = vmatprep.subr.mxu0 0.0
        %916 = vmatpush1.msra.mxu0 %v802
        %917 = vmatprep.subr.mxu0 0.0
        %918 = vmatpush1.msra.mxu0 %v801
        %919 = vmatprep.subr.mxu0 0.0
        %920 = vmatpush1.msra.mxu0 %v800
        %921 = vmatprep.subr.mxu0 0.0
        %922 = vmatpush1.msra.mxu0 %v799
        %923 = vmatprep.subr.mxu0 0.0
        %924 = vmatpush1.msra.mxu0 %v798
        %925 = vmatprep.subr.mxu0 0.0
        %926 = vmatpush1.msra.mxu0 %v797
        %927 = vmatprep.subr.mxu0 0.0
        %928 = vmatpush1.msra.mxu0 %v796
        %929 = vmatprep.subr.mxu0 0.0
        %930 = vmatpush1.msra.mxu0 %v795
        %931 = vmatprep.subr.mxu0 0.0
        %932 = vmatpush1.msra.mxu0 %v794
        %933 = vmatprep.subr.mxu0 0.0
        %934 = vmatpush1.msra.mxu0 %v793
        %935 = vmatprep.subr.mxu0 0.0
        %936 = vmatpush2.msra.mxu0 0.0
        %937 = vmatprep.subr.mxu0 0.0
        %938 = vmatpush2.msra.mxu0 0.0
        %939 = vmatprep.subr.mxu0 0.0
        %940 = vmatpush2.msra.mxu0 0.0
        %941 = vmatprep.subr.mxu0 0.0
        %942 = vmatpush2.msra.mxu0 0.0
        %943 = vmatprep.subr.mxu0 0.0
        %944 = vmatpush2.msra.mxu0 0.0
        %945 = vmatprep.subr.mxu0 0.0
        %946 = vmatpush2.msra.mxu0 0.0
        %947 = vmatprep.subr.mxu0 0.0
        %948 = vmatpush2.msra.mxu0 0.0
        %949 = vmatprep.subr.mxu0 0.0
        %950 = vmatpush2.msra.mxu0 0.0
        %951 = vmatprep.subr.mxu0 0.0
        %952 = vmatpush2.msra.mxu0 0.0
        %953 = vmatprep.subr.mxu0 0.0
        %954 = vmatpush2.msra.mxu0 0.0
        %955 = vmatprep.subr.mxu0 0.0
        %956 = vmatpush2.msra.mxu0 0.0
        %957 = vmatprep.subr.mxu0 0.0
        %958 = vmatpush2.msra.mxu0 0.0
        %959 = vmatprep.subr.mxu0 0.0
        %960 = vmatpush2.msra.mxu0 0.0
        %961 = vmatprep.subr.mxu0 0.0
        %962 = vmatpush2.msra.mxu0 0.0
        %963 = vmatprep.subr.mxu0 0.0
        %964 = vmatpush2.msra.mxu0 0.0
        %965 = vmatprep.subr.mxu0 0.0
        %966 = vmatpush2.msra.mxu0 0.0
        %967 = vmatprep.mubr.f32.mxu0 0.0
        %968 = vmatmul.mubr.f32.gmra.mxu0 %v791
        %v969 = vpop.f32.mrf.mxu0
        %v970 = vadd.f32 %v895, %v969
        %v971 = vpop.f32.mrf.mxu0
        %972 = vmatprep.mubr.f32.mxu0 0.0
        %973 = vmatmul.mubr.f32.gmra.mxu0 %v792
        %v974 = vpop.f32.mrf.mxu0
        %v975 = vadd.f32 %v900, %v974
        %v976 = vpop.f32.mrf.mxu0
        %977 = vdwg.mxu0
        %v978 = vld [vmem:[#allocation3 + $0x2] sm:$0xff]
        %v979 = vld [vmem:[#allocation3 + $0xa] sm:$0xff]
        %s980 = scalar_lea.vmem [#allocation9], 256
        %v981 = vld [vmem:[%s980] sm:$0xff]
        %v982 = vld [vmem:[%s980 + $0x8] sm:$0xff]
        %v983 = vld [vmem:[%s980 + $0x10] sm:$0xff]
        %v984 = vld [vmem:[%s980 + $0x18] sm:$0xff]
        %v985 = vld [vmem:[%s980 + $0x20] sm:$0xff]
        %v986 = vld [vmem:[%s980 + $0x28] sm:$0xff]
        %v987 = vld [vmem:[%s980 + $0x30] sm:$0xff]
        %v988 = vld [vmem:[%s980 + $0x38] sm:$0xff]
        %v989 = vld [vmem:[%s980 + $0x40] sm:$0xff]
        %v990 = vld [vmem:[%s980 + $0x48] sm:$0xff]
        %v991 = vld [vmem:[%s980 + $0x50] sm:$0xff]
        %v992 = vld [vmem:[%s980 + $0x58] sm:$0xff]
        %v993 = vld [vmem:[%s980 + $0x60] sm:$0xff]
        %v994 = vld [vmem:[%s980 + $0x68] sm:$0xff]
        %v995 = vld [vmem:[%s980 + $0x70] sm:$0xff]
        %v996 = vld [vmem:[%s980 + $0x78] sm:$0xff]
        %997 = vmatprep.subr.mxu0 0.0
        %998 = vmatpush1.msra.mxu0 %v996
        %999 = vmatprep.subr.mxu0 0.0
        %1000 = vmatpush1.msra.mxu0 %v995
        %1001 = vmatprep.subr.mxu0 0.0
        %1002 = vmatpush1.msra.mxu0 %v994
        %1003 = vmatprep.subr.mxu0 0.0
        %1004 = vmatpush1.msra.mxu0 %v993
        %1005 = vmatprep.subr.mxu0 0.0
        %1006 = vmatpush1.msra.mxu0 %v992
        %1007 = vmatprep.subr.mxu0 0.0
        %1008 = vmatpush1.msra.mxu0 %v991
        %1009 = vmatprep.subr.mxu0 0.0
        %1010 = vmatpush1.msra.mxu0 %v990
        %1011 = vmatprep.subr.mxu0 0.0
        %1012 = vmatpush1.msra.mxu0 %v989
        %1013 = vmatprep.subr.mxu0 0.0
        %1014 = vmatpush1.msra.mxu0 %v988
        %1015 = vmatprep.subr.mxu0 0.0
        %1016 = vmatpush1.msra.mxu0 %v987
        %1017 = vmatprep.subr.mxu0 0.0
        %1018 = vmatpush1.msra.mxu0 %v986
        %1019 = vmatprep.subr.mxu0 0.0
        %1020 = vmatpush1.msra.mxu0 %v985
        %1021 = vmatprep.subr.mxu0 0.0
        %1022 = vmatpush1.msra.mxu0 %v984
        %1023 = vmatprep.subr.mxu0 0.0
        %1024 = vmatpush1.msra.mxu0 %v983
        %1025 = vmatprep.subr.mxu0 0.0
        %1026 = vmatpush1.msra.mxu0 %v982
        %1027 = vmatprep.subr.mxu0 0.0
        %1028 = vmatpush1.msra.mxu0 %v981
        %1029 = vmatprep.subr.mxu0 0.0
        %1030 = vmatpush2.msra.mxu0 0.0
        %1031 = vmatprep.subr.mxu0 0.0
        %1032 = vmatpush2.msra.mxu0 0.0
        %1033 = vmatprep.subr.mxu0 0.0
        %1034 = vmatpush2.msra.mxu0 0.0
        %1035 = vmatprep.subr.mxu0 0.0
        %1036 = vmatpush2.msra.mxu0 0.0
        %1037 = vmatprep.subr.mxu0 0.0
        %1038 = vmatpush2.msra.mxu0 0.0
        %1039 = vmatprep.subr.mxu0 0.0
        %1040 = vmatpush2.msra.mxu0 0.0
        %1041 = vmatprep.subr.mxu0 0.0
        %1042 = vmatpush2.msra.mxu0 0.0
        %1043 = vmatprep.subr.mxu0 0.0
        %1044 = vmatpush2.msra.mxu0 0.0
        %1045 = vmatprep.subr.mxu0 0.0
        %1046 = vmatpush2.msra.mxu0 0.0
        %1047 = vmatprep.subr.mxu0 0.0
        %1048 = vmatpush2.msra.mxu0 0.0
        %1049 = vmatprep.subr.mxu0 0.0
        %1050 = vmatpush2.msra.mxu0 0.0
        %1051 = vmatprep.subr.mxu0 0.0
        %1052 = vmatpush2.msra.mxu0 0.0
        %1053 = vmatprep.subr.mxu0 0.0
        %1054 = vmatpush2.msra.mxu0 0.0
        %1055 = vmatprep.subr.mxu0 0.0
        %1056 = vmatpush2.msra.mxu0 0.0
        %1057 = vmatprep.subr.mxu0 0.0
        %1058 = vmatpush2.msra.mxu0 0.0
        %1059 = vmatprep.subr.mxu0 0.0
        %1060 = vmatpush2.msra.mxu0 0.0
        %1061 = vmatprep.mubr.f32.mxu0 0.0
        %1062 = vmatmul.mubr.f32.gmra.mxu0 %v978
        %v1063 = vpop.f32.mrf.mxu0
        %v1064 = vadd.f32 0.0, %v1063
        %v1065 = vpop.f32.mrf.mxu0
        %1066 = vmatprep.mubr.f32.mxu0 0.0
        %1067 = vmatmul.mubr.f32.gmra.mxu0 %v979
        %v1068 = vpop.f32.mrf.mxu0
        %v1069 = vadd.f32 0.0, %v1068
        %v1070 = vpop.f32.mrf.mxu0
        %1071 = vdwg.mxu0
        %v1072 = vadd.f32 %v970, %v1064
        %v1073 = vadd.f32 %v975, %v1069
        %v1074 = vadd.f32 %v484, %v1072
        %v1075 = vadd.f32 %v489, %v1073
        %v1076 = vld [vmem:[#allocation10] sm:$0x1]
        %v1078 = vlaneseq
        %v1079 = vshrl.u32 %v1078, 7
        %v1080 = vsub.s32 0, %v1079
        %v1081 = vrot.slane %v1076, %v1080
        %v1083 = vadd.f32 %v1074, %v1081
        %v1084 = vadd.f32 %v1075, %v1081
        %v1085 = vld [vmem:[%s7] sm:$0xff]
        %vm1086 = vcmask 130048
        %v1088 = vsel %vm1086, %v1085, 0
        %1090 = vmatprep.subr.mxu0 0.0
        %1091 = vmatpush1.msra.mxu0 0.0
        %1092 = vmatprep.subr.mxu0 0.0
        %1093 = vmatpush1.msra.mxu0 0.0
        %1094 = vmatprep.subr.mxu0 0.0
        %1095 = vmatpush1.msra.mxu0 0.0
        %1096 = vmatprep.subr.mxu0 0.0
        %1097 = vmatpush1.msra.mxu0 0.0
        %1098 = vmatprep.subr.mxu0 0.0
        %1099 = vmatpush1.msra.mxu0 0.0
        %1100 = vmatprep.subr.mxu0 0.0
        %1101 = vmatpush1.msra.mxu0 0.0
        %1102 = vmatprep.subr.mxu0 0.0
        %1103 = vmatpush1.msra.mxu0 0.0
        %1104 = vmatprep.subr.mxu0 0.0
        %1105 = vmatpush1.msra.mxu0 0.0
        %1106 = vmatprep.subr.mxu0 0.0
        %1107 = vmatpush1.msra.mxu0 0.0
        %1108 = vmatprep.subr.mxu0 0.0
        %1109 = vmatpush1.msra.mxu0 0.0
        %1110 = vmatprep.subr.mxu0 0.0
        %1111 = vmatpush1.msra.mxu0 0.0
        %1112 = vmatprep.subr.mxu0 0.0
        %1113 = vmatpush1.msra.mxu0 0.0
        %1114 = vmatprep.subr.mxu0 0.0
        %1115 = vmatpush1.msra.mxu0 0.0
        %1116 = vmatprep.subr.mxu0 0.0
        %1117 = vmatpush1.msra.mxu0 0.0
        %1118 = vmatprep.subr.mxu0 0.0
        %1119 = vmatpush1.msra.mxu0 %v1084
        %1120 = vmatprep.subr.mxu0 0.0
        %1121 = vmatpush1.msra.mxu0 %v1083
        %1122 = vmatprep.subr.mxu0 0.0
        %1123 = vmatpush2.msra.mxu0 0.0
        %1124 = vmatprep.subr.mxu0 0.0
        %1125 = vmatpush2.msra.mxu0 0.0
        %1126 = vmatprep.subr.mxu0 0.0
        %1127 = vmatpush2.msra.mxu0 0.0
        %1128 = vmatprep.subr.mxu0 0.0
        %1129 = vmatpush2.msra.mxu0 0.0
        %1130 = vmatprep.subr.mxu0 0.0
        %1131 = vmatpush2.msra.mxu0 0.0
        %1132 = vmatprep.subr.mxu0 0.0
        %1133 = vmatpush2.msra.mxu0 0.0
        %1134 = vmatprep.subr.mxu0 0.0
        %1135 = vmatpush2.msra.mxu0 0.0
        %1136 = vmatprep.subr.mxu0 0.0
        %1137 = vmatpush2.msra.mxu0 0.0
        %1138 = vmatprep.subr.mxu0 0.0
        %1139 = vmatpush2.msra.mxu0 0.0
        %1140 = vmatprep.subr.mxu0 0.0
        %1141 = vmatpush2.msra.mxu0 0.0
        %1142 = vmatprep.subr.mxu0 0.0
        %1143 = vmatpush2.msra.mxu0 0.0
        %1144 = vmatprep.subr.mxu0 0.0
        %1145 = vmatpush2.msra.mxu0 0.0
        %1146 = vmatprep.subr.mxu0 0.0
        %1147 = vmatpush2.msra.mxu0 0.0
        %1148 = vmatprep.subr.mxu0 0.0
        %1149 = vmatpush2.msra.mxu0 0.0
        %1150 = vmatprep.subr.mxu0 0.0
        %1151 = vmatpush2.msra.mxu0 0.0
        %1152 = vmatprep.subr.mxu0 0.0
        %1153 = vmatpush2.msra.mxu0 0.0
        %1154 = vmatprep.mubr.f32.mxu0 0.0
        %1155 = vmatmul.mubr.f32.gmra.mxu0 %v1088
        %v1156 = vpop.f32.mrf.mxu0
        %v1157 = vadd.f32 0.0, %v1156
        %v1158 = vpop.f32.mrf.mxu0
        %1159 = vdwg.mxu0
        %v1160 = vld [vmem:[%s8] sm:$0xff]
        %v1161 = vld [vmem:[%s8 + $0x8] sm:$0xff]
        %v1162 = vld [vmem:[%s8 + $0x10] sm:$0xff]
        %v1163 = vld [vmem:[%s8 + $0x18] sm:$0xff]
        %v1164 = vld [vmem:[%s8 + $0x20] sm:$0xff]
        %v1165 = vld [vmem:[%s8 + $0x28] sm:$0xff]
        %v1166 = vld [vmem:[%s8 + $0x30] sm:$0xff]
        %v1167 = vld [vmem:[%s8 + $0x38] sm:$0xff]
        %v1168 = vld [vmem:[%s8 + $0x40] sm:$0xff]
        %v1169 = vld [vmem:[%s8 + $0x48] sm:$0xff]
        %v1170 = vld [vmem:[%s8 + $0x50] sm:$0xff]
        %v1171 = vld [vmem:[%s8 + $0x58] sm:$0xff]
        %v1172 = vld [vmem:[%s8 + $0x60] sm:$0xff]
        %v1173 = vld [vmem:[%s8 + $0x68] sm:$0xff]
        %v1174 = vld [vmem:[%s8 + $0x70] sm:$0xff]
        %v1175 = vld [vmem:[%s8 + $0x78] sm:$0xff]
        %1176 = vmatprep.subr.mxu0 0.0
        %1177 = vmatpush1.msra.mxu0 %v1175
        %1178 = vmatprep.subr.mxu0 0.0
        %1179 = vmatpush1.msra.mxu0 %v1174
        %1180 = vmatprep.subr.mxu0 0.0
        %1181 = vmatpush1.msra.mxu0 %v1173
        %1182 = vmatprep.subr.mxu0 0.0
        %1183 = vmatpush1.msra.mxu0 %v1172
        %1184 = vmatprep.subr.mxu0 0.0
        %1185 = vmatpush1.msra.mxu0 %v1171
        %1186 = vmatprep.subr.mxu0 0.0
        %1187 = vmatpush1.msra.mxu0 %v1170
        %1188 = vmatprep.subr.mxu0 0.0
        %1189 = vmatpush1.msra.mxu0 %v1169
        %1190 = vmatprep.subr.mxu0 0.0
        %1191 = vmatpush1.msra.mxu0 %v1168
        %1192 = vmatprep.subr.mxu0 0.0
        %1193 = vmatpush1.msra.mxu0 %v1167
        %1194 = vmatprep.subr.mxu0 0.0
        %1195 = vmatpush1.msra.mxu0 %v1166
        %1196 = vmatprep.subr.mxu0 0.0
        %1197 = vmatpush1.msra.mxu0 %v1165
        %1198 = vmatprep.subr.mxu0 0.0
        %1199 = vmatpush1.msra.mxu0 %v1164
        %1200 = vmatprep.subr.mxu0 0.0
        %1201 = vmatpush1.msra.mxu0 %v1163
        %1202 = vmatprep.subr.mxu0 0.0
        %1203 = vmatpush1.msra.mxu0 %v1162
        %1204 = vmatprep.subr.mxu0 0.0
        %1205 = vmatpush1.msra.mxu0 %v1161
        %1206 = vmatprep.subr.mxu0 0.0
        %1207 = vmatpush1.msra.mxu0 %v1160
        %1208 = vmatprep.subr.mxu0 0.0
        %1209 = vmatpush2.msra.mxu0 0.0
        %1210 = vmatprep.subr.mxu0 0.0
        %1211 = vmatpush2.msra.mxu0 0.0
        %1212 = vmatprep.subr.mxu0 0.0
        %1213 = vmatpush2.msra.mxu0 0.0
        %1214 = vmatprep.subr.mxu0 0.0
        %1215 = vmatpush2.msra.mxu0 0.0
        %1216 = vmatprep.subr.mxu0 0.0
        %1217 = vmatpush2.msra.mxu0 0.0
        %1218 = vmatprep.subr.mxu0 0.0
        %1219 = vmatpush2.msra.mxu0 0.0
        %1220 = vmatprep.subr.mxu0 0.0
        %1221 = vmatpush2.msra.mxu0 0.0
        %1222 = vmatprep.subr.mxu0 0.0
        %1223 = vmatpush2.msra.mxu0 0.0
        %1224 = vmatprep.subr.mxu0 0.0
        %1225 = vmatpush2.msra.mxu0 0.0
        %1226 = vmatprep.subr.mxu0 0.0
        %1227 = vmatpush2.msra.mxu0 0.0
        %1228 = vmatprep.subr.mxu0 0.0
        %1229 = vmatpush2.msra.mxu0 0.0
        %1230 = vmatprep.subr.mxu0 0.0
        %1231 = vmatpush2.msra.mxu0 0.0
        %1232 = vmatprep.subr.mxu0 0.0
        %1233 = vmatpush2.msra.mxu0 0.0
        %1234 = vmatprep.subr.mxu0 0.0
        %1235 = vmatpush2.msra.mxu0 0.0
        %1236 = vmatprep.subr.mxu0 0.0
        %1237 = vmatpush2.msra.mxu0 0.0
        %1238 = vmatprep.subr.mxu0 0.0
        %1239 = vmatpush2.msra.mxu0 0.0
        %1240 = vmatprep.mubr.f32.mxu0 0.0
        %1241 = vmatmul.mubr.f32.gmra.mxu0 %v1157
        %v1242 = vpop.f32.mrf.mxu0
        %v1243 = vadd.f32 0.0, %v1242
        %v1244 = vpop.f32.mrf.mxu0
        %1245 = vdwg.mxu0
        %1246 = vst.msk [vmem:[%s392] sm:$0xff] %vm410, %v1243
        %s1247 = sand.u32 %s230, 1
        %s1248 = scalar_lea.sflag [#allocation6], %s1247
        %s1249 = sand.u32 %s230, 1
        %s1250 = smul.addr %s1249, 8
        %s1251 = scalar_lea.vmem [#allocation12], %s1250
        // Predicated region
        $region73: #{tpu_custom_call.1} parent=55 // pred_check
          %p1252 = pneg %p240
        $region74: #{tpu_custom_call.1} parent=55 // pred_check_branch
          %1254 = sbr.rel (%p1252) target = $region76
        $region75: #{tpu_custom_call.1} parent=55 // pred_region
          %s1256 = ssub.s32 128, 128
          %1257 = vsyncadd %s1248, %s1256
          %s1258 = smul.addr %s28, 128
          %s1259 = scalar_lea.hbm %s9, %s1258
          %s1261 = sshll.u32 %s1251, 4
          %s1262 = int_to_ptr.vmem [resolvable:$true] %s1261
          %1264 = dma.vmem_to_hbm [thread:$0]  %s1262, 128, %s1259, %s1248
        $region76: #{tpu_custom_call.1} parent=55 // pred_fallthru
          _
      $region56: #{tpu_custom_call.1} parent=5 // pred_fallthru
        _
      %p1265 = scmp.le.s32.totalorder 2, %s23
      // Predicated region
      $region77: #{tpu_custom_call.1} parent=5 // pred_check
        %p1266 = pneg %p1265
      $region78: #{tpu_custom_call.1} parent=5 // pred_check_branch
        %1268 = sbr.rel (%p1266) target = $region80
      $region79: #{tpu_custom_call.1} parent=5 // pred_region
        %s1269 = ssub.s32 %s23, 2
        // Predicated region
        $region81: #{tpu_custom_call.1} parent=79 // pred_check
          %p1270 = pneg %p246
        $region82: #{tpu_custom_call.1} parent=79 // pred_check_branch
          %1272 = sbr.rel (%p1270) target = $region84
        $region83: #{tpu_custom_call.1} parent=79 // pred_region
          %s1273 = sand.u32 %s231, 1
          %s1274 = scalar_lea.sflag [#allocation6], %s1273
          %s1275 = sand.u32 %s231, 1
          %s1276 = smul.addr %s1275, 8
          %s1277 = scalar_lea.vmem [#allocation12], %s1276
          %1278 = dma.done %s1274, 128
        $region84: #{tpu_custom_call.1} parent=79 // pred_fallthru
          _
      $region80: #{tpu_custom_call.1} parent=5 // pred_fallthru
        _
    $region6: #{tpu_custom_call.1} parent=1 // loop_footer
      %s27 = sadd.s32 1, %s23
    $region7: #{tpu_custom_call.1} parent=1 // loop_footer_branch
      %22 = sbr.rel target = $region3
    $region8: #{tpu_custom_call.1} parent=1 // loop_exit
      _
    %1279 = vsyncpa [#allocation5], 1
    %s1280 = scalar_lea.sflag [#allocation5], 1
    %1281 = vsyncpa %s1280, 1
    %1282 = vsyncpa [#allocation8], 1
    %1283 = vsyncpa [#allocation11], 1
    %1284 = vsyncpa [#allocation6], 1
    %s1285 = scalar_lea.sflag [#allocation6], 1
    %1286 = vsyncpa %s1285, 1

</llo_original>
